<compile_context>
chip_gen: v6e
topology: v6e:2x2x1
jax: 0.10.0
libtpu: 0.0.40
codegen_flags: <defaults>
</compile_context>

<pallas_src>
import functools

import jax
import jax.numpy as jnp
from jax.experimental import pallas as pl
from jax.experimental.pallas import tpu as pltpu


def _toeplitz_conv_weights(w_oihw, w_in, w_out, stride, in_channel_major):
    """Fold the 3 horizontal taps, the pad=1 x-halo and the x-stride of a 3x3
    conv into 3 block-Toeplitz matrices (one per vertical tap ky).

    Returns m of shape (3, w_in*Ci, w_out*Co) such that
        out_row[y_out]  (lanes ordered (x_out, co))
          = sum_ky  in_row[y_out*stride + ky - 1] @ m[ky]
    where in_row lanes are ordered (ci, x_in) if in_channel_major else
    (x_in, ci), and rows outside [0, H) are zero (vertical halo).
    """
    co = w_oihw.shape[0]
    ci = w_oihw.shape[1]
    w_t = jnp.transpose(w_oihw, (2, 3, 1, 0)).astype(jnp.float32)  # (ky,kx,ci,co)

    x_in = jnp.arange(w_in)
    x_out = jnp.arange(w_out)
    kx = x_in[:, None] - stride * x_out[None, :] + 1          # (w_in, w_out)
    valid = ((kx >= 0) & (kx <= 2)).astype(jnp.float32)
    kx_c = jnp.clip(kx, 0, 2)

    # blocks[ky, x_in, x_out, ci, co] = w[ky, kx, ci, co] if tap valid else 0
    blocks = w_t[:, kx_c, :, :] * valid[None, :, :, None, None]
    if in_channel_major:                       # K rows ordered (ci, x_in)
        m = jnp.transpose(blocks, (0, 3, 1, 2, 4))
        return m.reshape(3, ci * w_in, w_out * co)
    else:                                      # K rows ordered (x_in, ci)
        m = jnp.transpose(blocks, (0, 1, 3, 2, 4))
        return m.reshape(3, w_in * ci, w_out * co)


def _make_block_kernel(H, W, Cin, C, stride, bt):
    H2 = (H - 1) // stride + 1
    W2 = (W - 1) // stride + 1
    K1 = Cin * W       # lane width of layer-1 input rows
    K2 = W * C         # lane width of layer-1 output / layer-2 input rows
    K3 = W2 * C        # lane width of layer-2/3 output rows

    def kernel(x_ref, m1_ref, b1_ref, m2_ref, b2_ref, m3_ref, b3_ref,
               o_ref, pad1, pad2, pad3):
        # Zero only the 2 vertical-halo rows of each pad scratch; the interior
        # is fully overwritten below.  Re-done every grid step (safe under
        # "parallel" semantics, and still only 6 single-row stores).
        pad1[0:1, :] = jnp.zeros((1, K1), jnp.float32)
        pad1[H + 1:H + 2, :] = jnp.zeros((1, K1), jnp.float32)
        pad2[0:1, :] = jnp.zeros((1, K2), jnp.float32)
        pad2[H + 1:H + 2, :] = jnp.zeros((1, K2), jnp.float32)
        pad3[0:1, :] = jnp.zeros((1, K3), jnp.float32)
        pad3[H2 + 1:H2 + 2, :] = jnp.zeros((1, K3), jnp.float32)

        for s in range(bt):        # static unroll over the samples of this step
            # ----- layer 1: Cin -> C, stride 1 ------------------------------
            # NCHW sample -> one lane-dense (H, Cin*W) slab (channel-major
            # lanes, matching m1's row order); one aligned interior store.
            x_s = jnp.concatenate(
                [x_ref[s, ci].astype(jnp.float32) for ci in range(Cin)],
                axis=-1)                                         # (H, Cin*W)
            pad1[1:H + 1, :] = x_s
            acc = jnp.zeros((H, K2), jnp.float32)
            for ky in range(3):
                acc = acc + jnp.dot(pad1[ky:ky + H, :], m1_ref[ky],
                                    preferred_element_type=jnp.float32)
            y1 = jnp.maximum(acc + b1_ref[...], 0.0)             # (H, W*C)

            # ----- layer 2: C -> C, stride s (intermediate stays in VMEM) ---
            pad2[1:H + 1, :] = y1
            acc = jnp.zeros((H2, K3), jnp.float32)
            for ky in range(3):
                if stride == 1:
                    rows = pad2[ky:ky + H2, :]
                else:
                    rows = pad2[pl.ds(ky, H2, stride=stride), :]
                acc = acc + jnp.dot(rows, m2_ref[ky],
                                    preferred_element_type=jnp.float32)
            y2 = jnp.maximum(acc + b2_ref[...], 0.0)             # (H2, W2*C)

            # ----- layer 3: C -> C, stride 1 --------------------------------
            pad3[1:H2 + 1, :] = y2
            acc = jnp.zeros((H2, K3), jnp.float32)
            for ky in range(3):
                acc = acc + jnp.dot(pad3[ky:ky + H2, :], m3_ref[ky],
                                    preferred_element_type=jnp.float32)
            y3 = jnp.maximum(acc + b3_ref[...], 0.0)             # (H2, W2*C)

            o_ref[s] = y3.astype(o_ref.dtype)    # lane-dense output store

    return kernel, H2, W2


@functools.partial(jax.jit, static_argnums=(2,))
def block_forward(x_nchw, params, stride):
    """Forward pass matching PyTorch Block.forward (NCHW in, NCHW out)."""
    N, Cin, H, W = x_nchw.shape
    C = params["w1"].shape[0]

    # Batch tiling: keep 2 grid steps when possible so both v7x TensorCores
    # get work; the ~0.35us/step overhead of 2 steps on v5e/v6e is noise.
    bt = N // 2 if (N >= 2 and N % 2 == 0) else 1
    grid_n = N // bt

    kernel, H2, W2 = _make_block_kernel(H, W, Cin, C, stride, bt)

    # Block-Toeplitz weight slabs (horizontal taps + x-halo + x-stride folded
    # in) and lane-tiled biases, built once per call.
    m1 = _toeplitz_conv_weights(params["w1"], W, W, 1, in_channel_major=True)
    m2 = _toeplitz_conv_weights(params["w2"], W, W2, stride, in_channel_major=False)
    m3 = _toeplitz_conv_weights(params["w3"], W2, W2, 1, in_channel_major=False)
    b1 = jnp.tile(params["b1"].astype(jnp.float32), W).reshape(1, W * C)
    b2 = jnp.tile(params["b2"].astype(jnp.float32), W2).reshape(1, W2 * C)
    b3 = jnp.tile(params["b3"].astype(jnp.float32), W2).reshape(1, W2 * C)

    out = pl.pallas_call(
        kernel,
        out_shape=jax.ShapeDtypeStruct((N, H2, W2 * C), x_nchw.dtype),
        grid=(grid_n,),
        in_specs=[
            pl.BlockSpec((bt, Cin, H, W), lambda n: (n, 0, 0, 0)),   # NCHW input
            pl.BlockSpec((3, Cin * W, W * C), lambda n: (0, 0, 0)),
            pl.BlockSpec((1, W * C), lambda n: (0, 0)),
            pl.BlockSpec((3, W * C, W2 * C), lambda n: (0, 0, 0)),
            pl.BlockSpec((1, W2 * C), lambda n: (0, 0)),
            pl.BlockSpec((3, W2 * C, W2 * C), lambda n: (0, 0, 0)),
            pl.BlockSpec((1, W2 * C), lambda n: (0, 0)),
        ],
        out_specs=pl.BlockSpec((bt, H2, W2 * C), lambda n: (n, 0, 0)),
        scratch_shapes=[
            pltpu.VMEM((H + 2, Cin * W), jnp.float32),    # layer-1 y-halo pad
            pltpu.VMEM((H + 2, W * C), jnp.float32),      # layer-2 y-halo pad
            pltpu.VMEM((H2 + 2, W2 * C), jnp.float32),    # layer-3 y-halo pad
        ],
        compiler_params=pltpu.CompilerParams(
            dimension_semantics=("parallel",)),   # v7x: steps split across TCs
    )(x_nchw, m1, b1, m2, b2, m3, b3)

    # (N, H2, W2*C) lane-dense kernel output -> NCHW (small wrapper transpose).
    return jnp.transpose(out.reshape(N, H2, W2, C), (0, 3, 1, 2))


# ----------------------------- reference -----------------------------------
def _conv_relu_reference(x_nchw, w_oihw, b, stride):
    out = jax.lax.conv_general_dilated(
        x_nchw, w_oihw, window_strides=(stride, stride),
        padding=((1, 1), (1, 1)),
        dimension_numbers=("NCHW", "OIHW", "NCHW"))
    return jnp.maximum(out + b.reshape(1, -1, 1, 1), 0.0)


def block_reference(x_nchw, params, stride):
    x = _conv_relu_reference(x_nchw, params["w1"], params["b1"], 1)
    x = _conv_relu_reference(x, params["w2"], params["b2"], stride)
    x = _conv_relu_reference(x, params["w3"], params["b3"], 1)
    return x


if __name__ == "__main__":
    # Small shapes: batch=2, input_channels=4, output_channels=8,
    # spatial=16x16, stride=2 on the middle conv.
    N, Cin, Cout, H, W = 2, 4, 8, 16, 16
    stride = 2

    key = jax.random.PRNGKey(0)
    k = jax.random.split(key, 7)

    # Parameters in PyTorch layout: OIHW weights, (Cout,) biases.
    params = {
        "w1": 0.1 * jax.random.normal(k[0], (Cout, Cin, 3, 3), jnp.float32),
        "b1": 0.1 * jax.random.normal(k[1], (Cout,), jnp.float32),
        "w2": 0.1 * jax.random.normal(k[2], (Cout, Cout, 3, 3), jnp.float32),
        "b2": 0.1 * jax.random.normal(k[3], (Cout,), jnp.float32),
        "w3": 0.1 * jax.random.normal(k[4], (Cout, Cout, 3, 3), jnp.float32),
        "b3": 0.1 * jax.random.normal(k[5], (Cout,), jnp.float32),
    }
    x = jax.random.normal(k[6], (N, Cin, H, W), jnp.float32)   # NCHW like PyTorch

    out = jax.block_until_ready(block_forward(x, params, stride))

    # Shape must match PyTorch: (N, Cout, (H-1)//s + 1, (W-1)//s + 1)
    expected_shape = (N, Cout, (H - 1) // stride + 1, (W - 1) // stride + 1)
    assert out.shape == expected_shape, (out.shape, expected_shape)

    # Numerical check against XLA conv reference.
    ref = jax.block_until_ready(block_reference(x, params, stride))
    assert jnp.allclose(out, ref, atol=1e-4, rtol=1e-4), "mismatch vs reference"

    print("KERNEL_OK")
</pallas_src>

<mosaic_0001>
module attributes {stable_mosaic.version = 11 : i64} {
  func.func @kernel(%arg0: i32, %arg1: memref<1x4x16x16xf32, #tpu.memory_space<vmem>>, %arg2: memref<3x64x128xf32, #tpu.memory_space<vmem>>, %arg3: memref<1x128xf32, #tpu.memory_space<vmem>>, %arg4: memref<3x128x64xf32, #tpu.memory_space<vmem>>, %arg5: memref<1x64xf32, #tpu.memory_space<vmem>>, %arg6: memref<3x64x64xf32, #tpu.memory_space<vmem>>, %arg7: memref<1x64xf32, #tpu.memory_space<vmem>>, %arg8: memref<1x8x64xf32, #tpu.memory_space<vmem>>, %arg9: memref<18x64xf32, #tpu.memory_space<vmem>>, %arg10: memref<18x128xf32, #tpu.memory_space<vmem>>, %arg11: memref<10x64xf32, #tpu.memory_space<vmem>>) attributes {dimension_semantics = [#tpu.dimension_semantics<parallel>], iteration_bounds = array<i64: 2>, scalar_prefetch = 0 : i64, scratch_operands = 3 : i64, tpu.core_type = #tpu.core_type<tc>, window_params = [{transform_indices = @transform_0, window_bounds = array<i64: 1, 4, 16, 16>}, {pipeline_mode = #tpu.pipeline_mode<synchronous>, transform_indices = @transform_1, window_bounds = array<i64: 3, 64, 128>}, {pipeline_mode = #tpu.pipeline_mode<synchronous>, transform_indices = @transform_2, window_bounds = array<i64: 1, 128>}, {pipeline_mode = #tpu.pipeline_mode<synchronous>, transform_indices = @transform_3, window_bounds = array<i64: 3, 128, 64>}, {pipeline_mode = #tpu.pipeline_mode<synchronous>, transform_indices = @transform_4, window_bounds = array<i64: 1, 64>}, {pipeline_mode = #tpu.pipeline_mode<synchronous>, transform_indices = @transform_5, window_bounds = array<i64: 3, 64, 64>}, {pipeline_mode = #tpu.pipeline_mode<synchronous>, transform_indices = @transform_6, window_bounds = array<i64: 1, 64>}, {transform_indices = @transform_7, window_bounds = array<i64: 1, 8, 64>}]} {
    %cst = arith.constant 0.000000e+00 : f32
    %0 = vector.broadcast %cst : f32 to vector<1x64xf32>
    %c0 = arith.constant 0 : index
    %c0_0 = arith.constant 0 : index
    %1 = vector.load %arg9[%c0, %c0_0] : memref<18x64xf32, #tpu.memory_space<vmem>>, vector<1x64xf32>
    tpu.vector_store %arg9[%c0, %c0_0], %0 {strides = array<i32>} : memref<18x64xf32, #tpu.memory_space<vmem>>, vector<1x64xf32>,
    %cst_1 = arith.constant 0.000000e+00 : f32
    %2 = vector.broadcast %cst_1 : f32 to vector<1x64xf32>
    %c17 = arith.constant 17 : index
    %c0_2 = arith.constant 0 : index
    %3 = vector.load %arg9[%c17, %c0_2] : memref<18x64xf32, #tpu.memory_space<vmem>>, vector<1x64xf32>
    tpu.vector_store %arg9[%c17, %c0_2], %2 {strides = array<i32>} : memref<18x64xf32, #tpu.memory_space<vmem>>, vector<1x64xf32>,
    %cst_3 = arith.constant 0.000000e+00 : f32
    %4 = vector.broadcast %cst_3 : f32 to vector<1x128xf32>
    %c0_4 = arith.constant 0 : index
    %c0_5 = arith.constant 0 : index
    %5 = vector.load %arg10[%c0_4, %c0_5] : memref<18x128xf32, #tpu.memory_space<vmem>>, vector<1x128xf32>
    tpu.vector_store %arg10[%c0_4, %c0_5], %4 {strides = array<i32>} : memref<18x128xf32, #tpu.memory_space<vmem>>, vector<1x128xf32>,
    %cst_6 = arith.constant 0.000000e+00 : f32
    %6 = vector.broadcast %cst_6 : f32 to vector<1x128xf32>
    %c17_7 = arith.constant 17 : index
    %c0_8 = arith.constant 0 : index
    %7 = vector.load %arg10[%c17_7, %c0_8] : memref<18x128xf32, #tpu.memory_space<vmem>>, vector<1x128xf32>
    tpu.vector_store %arg10[%c17_7, %c0_8], %6 {strides = array<i32>} : memref<18x128xf32, #tpu.memory_space<vmem>>, vector<1x128xf32>,
    %cst_9 = arith.constant 0.000000e+00 : f32
    %8 = vector.broadcast %cst_9 : f32 to vector<1x64xf32>
    %c0_10 = arith.constant 0 : index
    %c0_11 = arith.constant 0 : index
    %9 = vector.load %arg11[%c0_10, %c0_11] : memref<10x64xf32, #tpu.memory_space<vmem>>, vector<1x64xf32>
    tpu.vector_store %arg11[%c0_10, %c0_11], %8 {strides = array<i32>} : memref<10x64xf32, #tpu.memory_space<vmem>>, vector<1x64xf32>,
    %cst_12 = arith.constant 0.000000e+00 : f32
    %10 = vector.broadcast %cst_12 : f32 to vector<1x64xf32>
    %c9 = arith.constant 9 : index
    %c0_13 = arith.constant 0 : index
    %11 = vector.load %arg11[%c9, %c0_13] : memref<10x64xf32, #tpu.memory_space<vmem>>, vector<1x64xf32>
    tpu.vector_store %arg11[%c9, %c0_13], %10 {strides = array<i32>} : memref<10x64xf32, #tpu.memory_space<vmem>>, vector<1x64xf32>,
    %c0_14 = arith.constant 0 : index
    %c0_15 = arith.constant 0 : index
    %c0_16 = arith.constant 0 : index
    %c0_17 = arith.constant 0 : index
    %12 = vector.load %arg1[%c0_14, %c0_15, %c0_16, %c0_17] : memref<1x4x16x16xf32, #tpu.memory_space<vmem>>, vector<1x1x16x16xf32>
    %13 = vector.shape_cast %12 : vector<1x1x16x16xf32> to vector<16x16xf32>
    %c0_18 = arith.constant 0 : index
    %c1 = arith.constant 1 : index
    %c0_19 = arith.constant 0 : index
    %c0_20 = arith.constant 0 : index
    %14 = vector.load %arg1[%c0_18, %c1, %c0_19, %c0_20] : memref<1x4x16x16xf32, #tpu.memory_space<vmem>>, vector<1x1x16x16xf32>
    %15 = vector.shape_cast %14 : vector<1x1x16x16xf32> to vector<16x16xf32>
    %c0_21 = arith.constant 0 : index
    %c2 = arith.constant 2 : index
    %c0_22 = arith.constant 0 : index
    %c0_23 = arith.constant 0 : index
    %16 = vector.load %arg1[%c0_21, %c2, %c0_22, %c0_23] : memref<1x4x16x16xf32, #tpu.memory_space<vmem>>, vector<1x1x16x16xf32>
    %17 = vector.shape_cast %16 : vector<1x1x16x16xf32> to vector<16x16xf32>
    %c0_24 = arith.constant 0 : index
    %c3 = arith.constant 3 : index
    %c0_25 = arith.constant 0 : index
    %c0_26 = arith.constant 0 : index
    %18 = vector.load %arg1[%c0_24, %c3, %c0_25, %c0_26] : memref<1x4x16x16xf32, #tpu.memory_space<vmem>>, vector<1x1x16x16xf32>
    %19 = vector.shape_cast %18 : vector<1x1x16x16xf32> to vector<16x16xf32>
    %20 = tpu.concatenate %13, %15, %17, %19 in 1 : vector<16x16xf32>, vector<16x16xf32>, vector<16x16xf32>, vector<16x16xf32> -> vector<16x64xf32>
    %c1_27 = arith.constant 1 : index
    %c0_28 = arith.constant 0 : index
    %21 = vector.load %arg9[%c1_27, %c0_28] : memref<18x64xf32, #tpu.memory_space<vmem>>, vector<16x64xf32>
    tpu.vector_store %arg9[%c1_27, %c0_28], %20 {strides = array<i32>} : memref<18x64xf32, #tpu.memory_space<vmem>>, vector<16x64xf32>,
    %cst_29 = arith.constant 0.000000e+00 : f32
    %22 = vector.broadcast %cst_29 : f32 to vector<16x128xf32>
    %c0_30 = arith.constant 0 : index
    %c0_31 = arith.constant 0 : index
    %23 = vector.load %arg9[%c0_30, %c0_31] : memref<18x64xf32, #tpu.memory_space<vmem>>, vector<16x64xf32>
    %c0_32 = arith.constant 0 : index
    %c0_33 = arith.constant 0 : index
    %c0_34 = arith.constant 0 : index
    %24 = vector.load %arg2[%c0_32, %c0_33, %c0_34] : memref<3x64x128xf32, #tpu.memory_space<vmem>>, vector<1x64x128xf32>
    %25 = vector.shape_cast %24 : vector<1x64x128xf32> to vector<64x128xf32>
    %cst_35 = arith.constant dense<0.000000e+00> : vector<16x128xf32>
    %26 = tpu.matmul %23, %25, %cst_35 {dimension_numbers = #tpu.dot_dimension_numbers<[1], [0], [0], [1], [0, 0, 1, 1], [], []>} : vector<16x64xf32>, vector<64x128xf32>, vector<16x128xf32> -> vector<16x128xf32>
    %27 = arith.addf %22, %26 : vector<16x128xf32>
    %c1_36 = arith.constant 1 : index
    %c0_37 = arith.constant 0 : index
    %28 = vector.load %arg9[%c1_36, %c0_37] : memref<18x64xf32, #tpu.memory_space<vmem>>, vector<16x64xf32>
    %c1_38 = arith.constant 1 : index
    %c0_39 = arith.constant 0 : index
    %c0_40 = arith.constant 0 : index
    %29 = vector.load %arg2[%c1_38, %c0_39, %c0_40] : memref<3x64x128xf32, #tpu.memory_space<vmem>>, vector<1x64x128xf32>
    %30 = vector.shape_cast %29 : vector<1x64x128xf32> to vector<64x128xf32>
    %cst_41 = arith.constant dense<0.000000e+00> : vector<16x128xf32>
    %31 = tpu.matmul %28, %30, %cst_41 {dimension_numbers = #tpu.dot_dimension_numbers<[1], [0], [0], [1], [0, 0, 1, 1], [], []>} : vector<16x64xf32>, vector<64x128xf32>, vector<16x128xf32> -> vector<16x128xf32>
    %32 = arith.addf %27, %31 : vector<16x128xf32>
    %c2_42 = arith.constant 2 : index
    %c0_43 = arith.constant 0 : index
    %33 = vector.load %arg9[%c2_42, %c0_43] : memref<18x64xf32, #tpu.memory_space<vmem>>, vector<16x64xf32>
    %c2_44 = arith.constant 2 : index
    %c0_45 = arith.constant 0 : index
    %c0_46 = arith.constant 0 : index
    %34 = vector.load %arg2[%c2_44, %c0_45, %c0_46] : memref<3x64x128xf32, #tpu.memory_space<vmem>>, vector<1x64x128xf32>
    %35 = vector.shape_cast %34 : vector<1x64x128xf32> to vector<64x128xf32>
    %cst_47 = arith.constant dense<0.000000e+00> : vector<16x128xf32>
    %36 = tpu.matmul %33, %35, %cst_47 {dimension_numbers = #tpu.dot_dimension_numbers<[1], [0], [0], [1], [0, 0, 1, 1], [], []>} : vector<16x64xf32>, vector<64x128xf32>, vector<16x128xf32> -> vector<16x128xf32>
    %37 = arith.addf %32, %36 : vector<16x128xf32>
    %c0_48 = arith.constant 0 : index
    %c0_49 = arith.constant 0 : index
    %38 = vector.load %arg3[%c0_48, %c0_49] : memref<1x128xf32, #tpu.memory_space<vmem>>, vector<1x128xf32>
    %39 = vector.broadcast %38 : vector<1x128xf32> to vector<16x128xf32>
    %40 = arith.addf %37, %39 : vector<16x128xf32>
    %cst_50 = arith.constant 0.000000e+00 : f32
    %41 = vector.broadcast %cst_50 : f32 to vector<16x128xf32>
    %42 = arith.maximumf %40, %41 : vector<16x128xf32>
    %c1_51 = arith.constant 1 : index
    %c0_52 = arith.constant 0 : index
    %43 = vector.load %arg10[%c1_51, %c0_52] : memref<18x128xf32, #tpu.memory_space<vmem>>, vector<16x128xf32>
    tpu.vector_store %arg10[%c1_51, %c0_52], %42 {strides = array<i32>} : memref<18x128xf32, #tpu.memory_space<vmem>>, vector<16x128xf32>,
    %cst_53 = arith.constant 0.000000e+00 : f32
    %44 = vector.broadcast %cst_53 : f32 to vector<8x64xf32>
    %c0_54 = arith.constant 0 : index
    %c0_55 = arith.constant 0 : index
    %45 = tpu.strided_load %arg10[%c0_54, %c0_55] {strides = array<i32: 2, 1>} : memref<18x128xf32, #tpu.memory_space<vmem>>, vector<8x128xf32>
    %c0_56 = arith.constant 0 : index
    %c0_57 = arith.constant 0 : index
    %c0_58 = arith.constant 0 : index
    %46 = vector.load %arg4[%c0_56, %c0_57, %c0_58] : memref<3x128x64xf32, #tpu.memory_space<vmem>>, vector<1x128x64xf32>
    %47 = vector.shape_cast %46 : vector<1x128x64xf32> to vector<128x64xf32>
    %cst_59 = arith.constant dense<0.000000e+00> : vector<8x64xf32>
    %48 = tpu.matmul %45, %47, %cst_59 {dimension_numbers = #tpu.dot_dimension_numbers<[1], [0], [0], [1], [0, 0, 1, 1], [], []>} : vector<8x128xf32>, vector<128x64xf32>, vector<8x64xf32> -> vector<8x64xf32>
    %49 = arith.addf %44, %48 : vector<8x64xf32>
    %c1_60 = arith.constant 1 : index
    %c0_61 = arith.constant 0 : index
    %50 = tpu.strided_load %arg10[%c1_60, %c0_61] {strides = array<i32: 2, 1>} : memref<18x128xf32, #tpu.memory_space<vmem>>, vector<8x128xf32>
    %c1_62 = arith.constant 1 : index
    %c0_63 = arith.constant 0 : index
    %c0_64 = arith.constant 0 : index
    %51 = vector.load %arg4[%c1_62, %c0_63, %c0_64] : memref<3x128x64xf32, #tpu.memory_space<vmem>>, vector<1x128x64xf32>
    %52 = vector.shape_cast %51 : vector<1x128x64xf32> to vector<128x64xf32>
    %cst_65 = arith.constant dense<0.000000e+00> : vector<8x64xf32>
    %53 = tpu.matmul %50, %52, %cst_65 {dimension_numbers = #tpu.dot_dimension_numbers<[1], [0], [0], [1], [0, 0, 1, 1], [], []>} : vector<8x128xf32>, vector<128x64xf32>, vector<8x64xf32> -> vector<8x64xf32>
    %54 = arith.addf %49, %53 : vector<8x64xf32>
    %c2_66 = arith.constant 2 : index
    %c0_67 = arith.constant 0 : index
    %55 = tpu.strided_load %arg10[%c2_66, %c0_67] {strides = array<i32: 2, 1>} : memref<18x128xf32, #tpu.memory_space<vmem>>, vector<8x128xf32>
    %c2_68 = arith.constant 2 : index
    %c0_69 = arith.constant 0 : index
    %c0_70 = arith.constant 0 : index
    %56 = vector.load %arg4[%c2_68, %c0_69, %c0_70] : memref<3x128x64xf32, #tpu.memory_space<vmem>>, vector<1x128x64xf32>
    %57 = vector.shape_cast %56 : vector<1x128x64xf32> to vector<128x64xf32>
    %cst_71 = arith.constant dense<0.000000e+00> : vector<8x64xf32>
    %58 = tpu.matmul %55, %57, %cst_71 {dimension_numbers = #tpu.dot_dimension_numbers<[1], [0], [0], [1], [0, 0, 1, 1], [], []>} : vector<8x128xf32>, vector<128x64xf32>, vector<8x64xf32> -> vector<8x64xf32>
    %59 = arith.addf %54, %58 : vector<8x64xf32>
    %c0_72 = arith.constant 0 : index
    %c0_73 = arith.constant 0 : index
    %60 = vector.load %arg5[%c0_72, %c0_73] : memref<1x64xf32, #tpu.memory_space<vmem>>, vector<1x64xf32>
    %61 = vector.broadcast %60 : vector<1x64xf32> to vector<8x64xf32>
    %62 = arith.addf %59, %61 : vector<8x64xf32>
    %cst_74 = arith.constant 0.000000e+00 : f32
    %63 = vector.broadcast %cst_74 : f32 to vector<8x64xf32>
    %64 = arith.maximumf %62, %63 : vector<8x64xf32>
    %c1_75 = arith.constant 1 : index
    %c0_76 = arith.constant 0 : index
    %65 = vector.load %arg11[%c1_75, %c0_76] : memref<10x64xf32, #tpu.memory_space<vmem>>, vector<8x64xf32>
    tpu.vector_store %arg11[%c1_75, %c0_76], %64 {strides = array<i32>} : memref<10x64xf32, #tpu.memory_space<vmem>>, vector<8x64xf32>,
    %cst_77 = arith.constant 0.000000e+00 : f32
    %66 = vector.broadcast %cst_77 : f32 to vector<8x64xf32>
    %c0_78 = arith.constant 0 : index
    %c0_79 = arith.constant 0 : index
    %67 = vector.load %arg11[%c0_78, %c0_79] : memref<10x64xf32, #tpu.memory_space<vmem>>, vector<8x64xf32>
    %c0_80 = arith.constant 0 : index
    %c0_81 = arith.constant 0 : index
    %c0_82 = arith.constant 0 : index
    %68 = vector.load %arg6[%c0_80, %c0_81, %c0_82] : memref<3x64x64xf32, #tpu.memory_space<vmem>>, vector<1x64x64xf32>
    %69 = vector.shape_cast %68 : vector<1x64x64xf32> to vector<64x64xf32>
    %cst_83 = arith.constant dense<0.000000e+00> : vector<8x64xf32>
    %70 = tpu.matmul %67, %69, %cst_83 {dimension_numbers = #tpu.dot_dimension_numbers<[1], [0], [0], [1], [0, 0, 1, 1], [], []>} : vector<8x64xf32>, vector<64x64xf32>, vector<8x64xf32> -> vector<8x64xf32>
    %71 = arith.addf %66, %70 : vector<8x64xf32>
    %c1_84 = arith.constant 1 : index
    %c0_85 = arith.constant 0 : index
    %72 = vector.load %arg11[%c1_84, %c0_85] : memref<10x64xf32, #tpu.memory_space<vmem>>, vector<8x64xf32>
    %c1_86 = arith.constant 1 : index
    %c0_87 = arith.constant 0 : index
    %c0_88 = arith.constant 0 : index
    %73 = vector.load %arg6[%c1_86, %c0_87, %c0_88] : memref<3x64x64xf32, #tpu.memory_space<vmem>>, vector<1x64x64xf32>
    %74 = vector.shape_cast %73 : vector<1x64x64xf32> to vector<64x64xf32>
    %cst_89 = arith.constant dense<0.000000e+00> : vector<8x64xf32>
    %75 = tpu.matmul %72, %74, %cst_89 {dimension_numbers = #tpu.dot_dimension_numbers<[1], [0], [0], [1], [0, 0, 1, 1], [], []>} : vector<8x64xf32>, vector<64x64xf32>, vector<8x64xf32> -> vector<8x64xf32>
    %76 = arith.addf %71, %75 : vector<8x64xf32>
    %c2_90 = arith.constant 2 : index
    %c0_91 = arith.constant 0 : index
    %77 = vector.load %arg11[%c2_90, %c0_91] : memref<10x64xf32, #tpu.memory_space<vmem>>, vector<8x64xf32>
    %c2_92 = arith.constant 2 : index
    %c0_93 = arith.constant 0 : index
    %c0_94 = arith.constant 0 : index
    %78 = vector.load %arg6[%c2_92, %c0_93, %c0_94] : memref<3x64x64xf32, #tpu.memory_space<vmem>>, vector<1x64x64xf32>
    %79 = vector.shape_cast %78 : vector<1x64x64xf32> to vector<64x64xf32>
    %cst_95 = arith.constant dense<0.000000e+00> : vector<8x64xf32>
    %80 = tpu.matmul %77, %79, %cst_95 {dimension_numbers = #tpu.dot_dimension_numbers<[1], [0], [0], [1], [0, 0, 1, 1], [], []>} : vector<8x64xf32>, vector<64x64xf32>, vector<8x64xf32> -> vector<8x64xf32>
    %81 = arith.addf %76, %80 : vector<8x64xf32>
    %c0_96 = arith.constant 0 : index
    %c0_97 = arith.constant 0 : index
    %82 = vector.load %arg7[%c0_96, %c0_97] : memref<1x64xf32, #tpu.memory_space<vmem>>, vector<1x64xf32>
    %83 = vector.broadcast %82 : vector<1x64xf32> to vector<8x64xf32>
    %84 = arith.addf %81, %83 : vector<8x64xf32>
    %cst_98 = arith.constant 0.000000e+00 : f32
    %85 = vector.broadcast %cst_98 : f32 to vector<8x64xf32>
    %86 = arith.maximumf %84, %85 : vector<8x64xf32>
    %c0_99 = arith.constant 0 : index
    %c0_100 = arith.constant 0 : index
    %c0_101 = arith.constant 0 : index
    %87 = vector.load %arg8[%c0_99, %c0_100, %c0_101] : memref<1x8x64xf32, #tpu.memory_space<vmem>>, vector<1x8x64xf32>
    %88 = vector.shape_cast %87 : vector<1x8x64xf32> to vector<8x64xf32>
    %89 = vector.shape_cast %86 : vector<8x64xf32> to vector<1x8x64xf32>
    tpu.vector_store %arg8[%c0_99, %c0_100, %c0_101], %89 {strides = array<i32>} : memref<1x8x64xf32, #tpu.memory_space<vmem>>, vector<1x8x64xf32>,
    return
  }
  func.func @transform_0(%arg0: i32) -> (i32, i32, i32, i32) {
    %c0_i32 = arith.constant 0 : i32
    %c0_i32_0 = arith.constant 0 : i32
    %c0_i32_1 = arith.constant 0 : i32
    %c0_i32_2 = arith.constant 0 : i32
    return %arg0, %c0_i32, %c0_i32_0, %c0_i32_1 : i32, i32, i32, i32
  }
  func.func @transform_1(%arg0: i32) -> (i32, i32, i32) {
    %c0_i32 = arith.constant 0 : i32
    %c0_i32_0 = arith.constant 0 : i32
    %c0_i32_1 = arith.constant 0 : i32
    %c0_i32_2 = arith.constant 0 : i32
    return %c0_i32, %c0_i32_0, %c0_i32_1 : i32, i32, i32
  }
  func.func @transform_2(%arg0: i32) -> (i32, i32) {
    %c0_i32 = arith.constant 0 : i32
    %c0_i32_0 = arith.constant 0 : i32
    %c0_i32_1 = arith.constant 0 : i32
    return %c0_i32, %c0_i32_0 : i32, i32
  }
  func.func @transform_3(%arg0: i32) -> (i32, i32, i32) {
    %c0_i32 = arith.constant 0 : i32
    %c0_i32_0 = arith.constant 0 : i32
    %c0_i32_1 = arith.constant 0 : i32
    %c0_i32_2 = arith.constant 0 : i32
    return %c0_i32, %c0_i32_0, %c0_i32_1 : i32, i32, i32
  }
  func.func @transform_4(%arg0: i32) -> (i32, i32) {
    %c0_i32 = arith.constant 0 : i32
    %c0_i32_0 = arith.constant 0 : i32
    %c0_i32_1 = arith.constant 0 : i32
    return %c0_i32, %c0_i32_0 : i32, i32
  }
  func.func @transform_5(%arg0: i32) -> (i32, i32, i32) {
    %c0_i32 = arith.constant 0 : i32
    %c0_i32_0 = arith.constant 0 : i32
    %c0_i32_1 = arith.constant 0 : i32
    %c0_i32_2 = arith.constant 0 : i32
    return %c0_i32, %c0_i32_0, %c0_i32_1 : i32, i32, i32
  }
  func.func @transform_6(%arg0: i32) -> (i32, i32) {
    %c0_i32 = arith.constant 0 : i32
    %c0_i32_0 = arith.constant 0 : i32
    %c0_i32_1 = arith.constant 0 : i32
    return %c0_i32, %c0_i32_0 : i32, i32
  }
  func.func @transform_7(%arg0: i32) -> (i32, i32, i32) {
    %c0_i32 = arith.constant 0 : i32
    %c0_i32_0 = arith.constant 0 : i32
    %c0_i32_1 = arith.constant 0 : i32
    return %arg0, %c0_i32, %c0_i32_0 : i32, i32, i32
  }
}

</mosaic_0001>

<llo_original>
// kernel: tile.18
$region0: #{tile.18}
  #allocation0 [shape = 's32[1]{0}', space=sflag, size = 0x4, scoped, tag = 'scoped memory for tile.18']
  %s0 = inlined_call_operand.vmem [shape: f32[8], index: 0, kind: input, shape index: {}]
  %s1 = inlined_call_operand.vmem [shape: f32[16,8], index: 1, kind: output, shape index: {}]
  // Predicated region
  $region2: #{tile.18} parent=0 // pred_check
    _
  $region3: #{tile.18} parent=0 // pred_check_branch
    %3 = sbr.rel (0) target = $region5
  $region4: #{tile.18} parent=0 // pred_region
    _
  $region5: #{tile.18} parent=0 // pred_fallthru
    _
  %v4 = vld [vmem:[%s0] ss:$0 sm:$0xff]
  %5 = vst [vmem:[%s1] sm:$0xff] %v4
  %s6 = scalar_lea.vmem %s1, 8
  %7 = vst [vmem:[%s6] sm:$0xff] %v4

// kernel: tile.19
$region0: #{tile.19}
  %s0 = inlined_call_operand.vmem [shape: f32[16,8], index: 0, kind: input, shape index: {}]
  %s1 = inlined_call_operand.vmem [shape: f32[1,128], index: 1, kind: output, shape index: {}]
  $region1: #{tile.19} parent=0
    #allocation0 [shape = 'u8[4096]{0}', space=vmem, size = 0x1000, scoped, tag = 'scoped mem for output reshape']
    %v2 = vld [vmem:[%s0] sm:$0x1]
    %vm3 = vcmask 64512
    %4 = vst.msk [vmem:[#allocation0] sm:$0x1] %vm3, %v2
    %s5 = scalar_lea.vmem %s0, 15
    %v6 = vld [vmem:[%s5] sm:$0x1]
    %7 = vrot.lane.b32.xlu0 %v6, 120
    %v8 = vpop.permute.xlu0 %7
    %vm9 = vcmask 1048512
    %10 = vst.msk [vmem:[#allocation0] sm:$0x1] %vm9, %v8
    %s11 = scalar_lea.vmem %s0, 14
    %v12 = vld [vmem:[%s11] sm:$0x1]
    %13 = vrot.lane.b32.xlu0 %v12, 112
    %v14 = vpop.permute.xlu0 %13
    %vm15 = vcmask 982912
    %16 = vst.msk [vmem:[#allocation0] sm:$0x1] %vm15, %v14
    %s17 = scalar_lea.vmem %s0, 13
    %v18 = vld [vmem:[%s17] sm:$0x1]
    %19 = vrot.lane.b32.xlu0 %v18, 104
    %v20 = vpop.permute.xlu0 %19
    %vm21 = vcmask 917312
    %22 = vst.msk [vmem:[#allocation0] sm:$0x1] %vm21, %v20
    %s23 = scalar_lea.vmem %s0, 12
    %v24 = vld [vmem:[%s23] sm:$0x1]
    %25 = vrot.lane.b32.xlu0 %v24, 96
    %v26 = vpop.permute.xlu0 %25
    %vm27 = vcmask 851712
    %28 = vst.msk [vmem:[#allocation0] sm:$0x1] %vm27, %v26
    %s29 = scalar_lea.vmem %s0, 11
    %v30 = vld [vmem:[%s29] sm:$0x1]
    %31 = vrot.lane.b32.xlu0 %v30, 88
    %v32 = vpop.permute.xlu0 %31
    %vm33 = vcmask 786112
    %34 = vst.msk [vmem:[#allocation0] sm:$0x1] %vm33, %v32
    %s35 = scalar_lea.vmem %s0, 10
    %v36 = vld [vmem:[%s35] sm:$0x1]
    %37 = vrot.lane.b32.xlu0 %v36, 80
    %v38 = vpop.permute.xlu0 %37
    %vm39 = vcmask 720512
    %40 = vst.msk [vmem:[#allocation0] sm:$0x1] %vm39, %v38
    %s41 = scalar_lea.vmem %s0, 9
    %v42 = vld [vmem:[%s41] sm:$0x1]
    %43 = vrot.lane.b32.xlu0 %v42, 72
    %v44 = vpop.permute.xlu0 %43
    %vm45 = vcmask 654912
    %46 = vst.msk [vmem:[#allocation0] sm:$0x1] %vm45, %v44
    %s47 = scalar_lea.vmem %s0, 8
    %v48 = vld [vmem:[%s47] sm:$0x1]
    %49 = vrot.lane.b32.xlu0 %v48, 64
    %v50 = vpop.permute.xlu0 %49
    %vm51 = vcmask 589312
    %52 = vst.msk [vmem:[#allocation0] sm:$0x1] %vm51, %v50
    %s53 = scalar_lea.vmem %s0, 7
    %v54 = vld [vmem:[%s53] sm:$0x1]
    %55 = vrot.lane.b32.xlu0 %v54, 56
    %v56 = vpop.permute.xlu0 %55
    %vm57 = vcmask 523712
    %58 = vst.msk [vmem:[#allocation0] sm:$0x1] %vm57, %v56
    %s59 = scalar_lea.vmem %s0, 6
    %v60 = vld [vmem:[%s59] sm:$0x1]
    %61 = vrot.lane.b32.xlu0 %v60, 48
    %v62 = vpop.permute.xlu0 %61
    %vm63 = vcmask 458112
    %64 = vst.msk [vmem:[#allocation0] sm:$0x1] %vm63, %v62
    %s65 = scalar_lea.vmem %s0, 5
    %v66 = vld [vmem:[%s65] sm:$0x1]
    %67 = vrot.lane.b32.xlu0 %v66, 40
    %v68 = vpop.permute.xlu0 %67
    %vm69 = vcmask 392512
    %70 = vst.msk [vmem:[#allocation0] sm:$0x1] %vm69, %v68
    %s71 = scalar_lea.vmem %s0, 4
    %v72 = vld [vmem:[%s71] sm:$0x1]
    %73 = vrot.lane.b32.xlu0 %v72, 32
    %v74 = vpop.permute.xlu0 %73
    %vm75 = vcmask 326912
    %76 = vst.msk [vmem:[#allocation0] sm:$0x1] %vm75, %v74
    %s77 = scalar_lea.vmem %s0, 3
    %v78 = vld [vmem:[%s77] sm:$0x1]
    %79 = vrot.lane.b32.xlu0 %v78, 24
    %v80 = vpop.permute.xlu0 %79
    %vm81 = vcmask 261312
    %82 = vst.msk [vmem:[#allocation0] sm:$0x1] %vm81, %v80
    %s83 = scalar_lea.vmem %s0, 2
    %v84 = vld [vmem:[%s83] sm:$0x1]
    %85 = vrot.lane.b32.xlu0 %v84, 16
    %v86 = vpop.permute.xlu0 %85
    %vm87 = vcmask 195712
    %88 = vst.msk [vmem:[#allocation0] sm:$0x1] %vm87, %v86
    %s89 = scalar_lea.vmem %s0, 1
    %v90 = vld [vmem:[%s89] sm:$0x1]
    %91 = vrot.lane.b32.xlu0 %v90, 8
    %v92 = vpop.permute.xlu0 %91
    %vm93 = vcmask 130112
    %94 = vst.msk [vmem:[#allocation0] sm:$0x1] %vm93, %v92
    %s96 = sshll.u32 1, 1
    %s97 = ssub.s32 %s96, 1
    %v99 = vld [vmem:[#allocation0] sm:%s97]
    %s100 = sshll.u32 1, 1
    %s101 = ssub.s32 %s100, 1
    %102 = vst [vmem:[%s1] sm:%s101] %v99

// kernel: tile.23
$region0: #{tile.23}
  #allocation0 [shape = 's32[1]{0}', space=sflag, size = 0x4, scoped, tag = 'scoped memory for tile.23']
  %s0 = inlined_call_operand.vmem [shape: f32[8], index: 0, kind: input, shape index: {}]
  %s1 = inlined_call_operand.vmem [shape: f32[8,8], index: 1, kind: output, shape index: {}]
  // Predicated region
  $region2: #{tile.23} parent=0 // pred_check
    _
  $region3: #{tile.23} parent=0 // pred_check_branch
    %3 = sbr.rel (0) target = $region5
  $region4: #{tile.23} parent=0 // pred_region
    _
  $region5: #{tile.23} parent=0 // pred_fallthru
    _
  %v4 = vld [vmem:[%s0] ss:$0 sm:$0xff]
  %5 = vst [vmem:[%s1] sm:$0xff] %v4

// kernel: tile.24
$region0: #{tile.24}
  %s0 = inlined_call_operand.vmem [shape: f32[8,8], index: 0, kind: input, shape index: {}]
  %s1 = inlined_call_operand.vmem [shape: f32[1,64], index: 1, kind: output, shape index: {}]
  $region1: #{tile.24} parent=0
    #allocation0 [shape = 'u8[4096]{0}', space=vmem, size = 0x1000, scoped, tag = 'scoped mem for output reshape']
    %v2 = vld [vmem:[%s0] sm:$0x1]
    %vm3 = vcmask 64512
    %4 = vst.msk [vmem:[#allocation0] sm:$0x1] %vm3, %v2
    %s5 = scalar_lea.vmem %s0, 7
    %v6 = vld [vmem:[%s5] sm:$0x1]
    %7 = vrot.lane.b32.xlu0 %v6, 56
    %v8 = vpop.permute.xlu0 %7
    %vm9 = vcmask 523712
    %10 = vst.msk [vmem:[#allocation0] sm:$0x1] %vm9, %v8
    %s11 = scalar_lea.vmem %s0, 6
    %v12 = vld [vmem:[%s11] sm:$0x1]
    %13 = vrot.lane.b32.xlu0 %v12, 48
    %v14 = vpop.permute.xlu0 %13
    %vm15 = vcmask 458112
    %16 = vst.msk [vmem:[#allocation0] sm:$0x1] %vm15, %v14
    %s17 = scalar_lea.vmem %s0, 5
    %v18 = vld [vmem:[%s17] sm:$0x1]
    %19 = vrot.lane.b32.xlu0 %v18, 40
    %v20 = vpop.permute.xlu0 %19
    %vm21 = vcmask 392512
    %22 = vst.msk [vmem:[#allocation0] sm:$0x1] %vm21, %v20
    %s23 = scalar_lea.vmem %s0, 4
    %v24 = vld [vmem:[%s23] sm:$0x1]
    %25 = vrot.lane.b32.xlu0 %v24, 32
    %v26 = vpop.permute.xlu0 %25
    %vm27 = vcmask 326912
    %28 = vst.msk [vmem:[#allocation0] sm:$0x1] %vm27, %v26
    %s29 = scalar_lea.vmem %s0, 3
    %v30 = vld [vmem:[%s29] sm:$0x1]
    %31 = vrot.lane.b32.xlu0 %v30, 24
    %v32 = vpop.permute.xlu0 %31
    %vm33 = vcmask 261312
    %34 = vst.msk [vmem:[#allocation0] sm:$0x1] %vm33, %v32
    %s35 = scalar_lea.vmem %s0, 2
    %v36 = vld [vmem:[%s35] sm:$0x1]
    %37 = vrot.lane.b32.xlu0 %v36, 16
    %v38 = vpop.permute.xlu0 %37
    %vm39 = vcmask 195712
    %40 = vst.msk [vmem:[#allocation0] sm:$0x1] %vm39, %v38
    %s41 = scalar_lea.vmem %s0, 1
    %v42 = vld [vmem:[%s41] sm:$0x1]
    %43 = vrot.lane.b32.xlu0 %v42, 8
    %v44 = vpop.permute.xlu0 %43
    %vm45 = vcmask 130112
    %46 = vst.msk [vmem:[#allocation0] sm:$0x1] %vm45, %v44
    %s48 = sshll.u32 1, 1
    %s49 = ssub.s32 %s48, 1
    %v51 = vld [vmem:[#allocation0] sm:%s49]
    %s52 = sshll.u32 1, 1
    %s53 = ssub.s32 %s52, 1
    %54 = vst [vmem:[%s1] sm:%s53] %v51

// kernel: block_forward.1
$region0: #{block_forward.1}
  #allocation0 [shape = 'u32[]', space=smem, size = 0x4, offset = 0x4, fixed_abs, tag = 'smem constant byte address 0x4 - core index']
  #allocation1 [shape = 'u32[144,128]{1,0:T(1,128)}', space=vmem, size = 0x12000, scoped, tag = 'internal scratch']
  #allocation2 [shape = 'f32[18,64]{1,0:T(8,128)}', space=vmem, size = 0x3000, scoped, tag = 'scratch operand']
  #allocation3 [shape = 'f32[18,128]{1,0:T(8,128)}', space=vmem, size = 0x3000, scoped, tag = 'scratch operand']
  #allocation4 [shape = 'f32[10,64]{1,0:T(8,128)}', space=vmem, size = 0x2000, scoped, tag = 'scratch operand']
  %s0 = inlined_call_operand.vmem [shape: f32[2,4,16,16], index: 0, kind: input, shape index: {}]
  %s1 = inlined_call_operand.vmem [shape: f32[3,64,128], index: 1, kind: input, shape index: {}]
  %s2 = inlined_call_operand.vmem [shape: f32[1,128], index: 2, kind: input, shape index: {}]
  %s3 = inlined_call_operand.vmem [shape: f32[3,128,64], index: 3, kind: input, shape index: {}]
  %s4 = inlined_call_operand.vmem [shape: f32[1,64], index: 4, kind: input, shape index: {}]
  %s5 = inlined_call_operand.vmem [shape: f32[3,64,64], index: 5, kind: input, shape index: {}]
  %s6 = inlined_call_operand.vmem [shape: f32[1,64], index: 6, kind: input, shape index: {}]
  %s7 = inlined_call_operand.vmem [shape: f32[2,8,64], index: 7, kind: output, shape index: {}]
  %s8 = sld [smem:[#allocation0]]
  $region61: #{block_forward.1} parent=0
    _
  %s10 = ssub.s32 1, %s8
  %s11 = scalar_select 0, %s10, %s8
  loop: start=0, step=1, limit=4
  $region2: #{block_forward.1} parent=0 // loop_pre_header
    _
  $region3: #{block_forward.1} parent=0 // loop_header
    %s13 = sphi 0, %s17
    %p14 = scmp.ge.s32.totalorder %s13, 4
    %s23 = sphi 0, %s25
    %s26 = sphi 0, %s23
    %s27 = sphi 0, %s26
    %s43 = sphi 0, %s27
    %s47 = sphi 0, %s47
    %s49 = sphi 0, %s47
    %s50 = sphi 0, %s49
    %s64 = sphi 0, %s50
    %s68 = sphi 0, %s68
    %s70 = sphi 0, %s68
    %s71 = sphi 0, %s70
    %s85 = sphi 0, %s71
    %s89 = sphi 0, %s89
    %s91 = sphi 0, %s89
    %s92 = sphi 0, %s91
    %s106 = sphi 0, %s92
    %s110 = sphi 0, %s110
    %s112 = sphi 0, %s110
    %s113 = sphi 0, %s112
    %s127 = sphi 0, %s113
    %s131 = sphi 0, %s131
    %s133 = sphi 0, %s131
    %s134 = sphi 0, %s133
    %s148 = sphi 0, %s134
    %s152 = sphi 0, %s152
    %s154 = sphi 0, %s152
    %s155 = sphi 0, %s154
    %s169 = sphi 0, %s155
    %s175 = sphi 0, %s177
    %s178 = sphi 0, %s175
    %s179 = sphi 0, %s178
    %s195 = sphi 0, %s179
  $region4: #{block_forward.1} parent=0 // loop_header_branch
    %16 = sbr.rel (%p14) target = $region8
  $region5: #{block_forward.1} parent=0 // loop_body
    %s18 = ssub.s32 %s13, 1
    %s19 = ssub.s32 %s13, 2
    %s20 = sadd.s32 %s13, 1
    %s21 = ssub.s32 %s13, %s20
    %p22 = scmp.eq.s32.totalorder %s21, 0
    %s24 = sadd.s32 %s23, 1
    %s25 = scalar_select %p22, %s23, %s24
    %p28 = pneg %p22
    %p29 = scmp.eq.s32.totalorder %s13, 1
    %p30 = por %p28, %p29
    %p31 = scmp.ne.s32.totalorder %s23, %s26
    %p32 = scmp.eq.s32.totalorder %s13, 0
    %p33 = por %p31, %p32
    %p34 = scmp.ne.s32.totalorder %s23, %s26
    %p35 = scmp.eq.s32.totalorder %s18, 1
    %p36 = por %p34, %p35
    %p37 = scmp.ne.s32.totalorder %s26, %s27
    %p38 = scmp.eq.s32.totalorder %s18, 0
    %p39 = por %p37, %p38
    %p40 = scmp.ne.s32.totalorder %s26, %s27
    %p41 = scmp.eq.s32.totalorder %s19, 1
    %p42 = por %p40, %p41
    %p44 = scmp.ne.s32.totalorder %s27, %s43
    %p45 = scmp.eq.s32.totalorder %s19, 0
    %p46 = por %p44, %p45
    %s48 = sadd.s32 %s47, 1
    %p51 = scmp.eq.s32.totalorder %s13, 1
    %p52 = scmp.ne.s32.totalorder %s47, %s49
    %p53 = scmp.eq.s32.totalorder %s13, 0
    %p54 = por %p52, %p53
    %p55 = scmp.ne.s32.totalorder %s47, %s49
    %p56 = scmp.eq.s32.totalorder %s18, 1
    %p57 = por %p55, %p56
    %p58 = scmp.ne.s32.totalorder %s49, %s50
    %p59 = scmp.eq.s32.totalorder %s18, 0
    %p60 = por %p58, %p59
    %p61 = scmp.ne.s32.totalorder %s49, %s50
    %p62 = scmp.eq.s32.totalorder %s19, 1
    %p63 = por %p61, %p62
    %p65 = scmp.ne.s32.totalorder %s50, %s64
    %p66 = scmp.eq.s32.totalorder %s19, 0
    %p67 = por %p65, %p66
    %s69 = sadd.s32 %s68, 1
    %p72 = scmp.eq.s32.totalorder %s13, 1
    %p73 = scmp.ne.s32.totalorder %s68, %s70
    %p74 = scmp.eq.s32.totalorder %s13, 0
    %p75 = por %p73, %p74
    %p76 = scmp.ne.s32.totalorder %s68, %s70
    %p77 = scmp.eq.s32.totalorder %s18, 1
    %p78 = por %p76, %p77
    %p79 = scmp.ne.s32.totalorder %s70, %s71
    %p80 = scmp.eq.s32.totalorder %s18, 0
    %p81 = por %p79, %p80
    %p82 = scmp.ne.s32.totalorder %s70, %s71
    %p83 = scmp.eq.s32.totalorder %s19, 1
    %p84 = por %p82, %p83
    %p86 = scmp.ne.s32.totalorder %s71, %s85
    %p87 = scmp.eq.s32.totalorder %s19, 0
    %p88 = por %p86, %p87
    %s90 = sadd.s32 %s89, 1
    %p93 = scmp.eq.s32.totalorder %s13, 1
    %p94 = scmp.ne.s32.totalorder %s89, %s91
    %p95 = scmp.eq.s32.totalorder %s13, 0
    %p96 = por %p94, %p95
    %p97 = scmp.ne.s32.totalorder %s89, %s91
    %p98 = scmp.eq.s32.totalorder %s18, 1
    %p99 = por %p97, %p98
    %p100 = scmp.ne.s32.totalorder %s91, %s92
    %p101 = scmp.eq.s32.totalorder %s18, 0
    %p102 = por %p100, %p101
    %p103 = scmp.ne.s32.totalorder %s91, %s92
    %p104 = scmp.eq.s32.totalorder %s19, 1
    %p105 = por %p103, %p104
    %p107 = scmp.ne.s32.totalorder %s92, %s106
    %p108 = scmp.eq.s32.totalorder %s19, 0
    %p109 = por %p107, %p108
    %s111 = sadd.s32 %s110, 1
    %p114 = scmp.eq.s32.totalorder %s13, 1
    %p115 = scmp.ne.s32.totalorder %s110, %s112
    %p116 = scmp.eq.s32.totalorder %s13, 0
    %p117 = por %p115, %p116
    %p118 = scmp.ne.s32.totalorder %s110, %s112
    %p119 = scmp.eq.s32.totalorder %s18, 1
    %p120 = por %p118, %p119
    %p121 = scmp.ne.s32.totalorder %s112, %s113
    %p122 = scmp.eq.s32.totalorder %s18, 0
    %p123 = por %p121, %p122
    %p124 = scmp.ne.s32.totalorder %s112, %s113
    %p125 = scmp.eq.s32.totalorder %s19, 1
    %p126 = por %p124, %p125
    %p128 = scmp.ne.s32.totalorder %s113, %s127
    %p129 = scmp.eq.s32.totalorder %s19, 0
    %p130 = por %p128, %p129
    %s132 = sadd.s32 %s131, 1
    %p135 = scmp.eq.s32.totalorder %s13, 1
    %p136 = scmp.ne.s32.totalorder %s131, %s133
    %p137 = scmp.eq.s32.totalorder %s13, 0
    %p138 = por %p136, %p137
    %p139 = scmp.ne.s32.totalorder %s131, %s133
    %p140 = scmp.eq.s32.totalorder %s18, 1
    %p141 = por %p139, %p140
    %p142 = scmp.ne.s32.totalorder %s133, %s134
    %p143 = scmp.eq.s32.totalorder %s18, 0
    %p144 = por %p142, %p143
    %p145 = scmp.ne.s32.totalorder %s133, %s134
    %p146 = scmp.eq.s32.totalorder %s19, 1
    %p147 = por %p145, %p146
    %p149 = scmp.ne.s32.totalorder %s134, %s148
    %p150 = scmp.eq.s32.totalorder %s19, 0
    %p151 = por %p149, %p150
    %s153 = sadd.s32 %s152, 1
    %p156 = scmp.eq.s32.totalorder %s13, 1
    %p157 = scmp.ne.s32.totalorder %s152, %s154
    %p158 = scmp.eq.s32.totalorder %s13, 0
    %p159 = por %p157, %p158
    %p160 = scmp.ne.s32.totalorder %s152, %s154
    %p161 = scmp.eq.s32.totalorder %s18, 1
    %p162 = por %p160, %p161
    %p163 = scmp.ne.s32.totalorder %s154, %s155
    %p164 = scmp.eq.s32.totalorder %s18, 0
    %p165 = por %p163, %p164
    %p166 = scmp.ne.s32.totalorder %s154, %s155
    %p167 = scmp.eq.s32.totalorder %s19, 1
    %p168 = por %p166, %p167
    %p170 = scmp.ne.s32.totalorder %s155, %s169
    %p171 = scmp.eq.s32.totalorder %s19, 0
    %p172 = por %p170, %p171
    %s173 = ssub.s32 %s13, %s20
    %p174 = scmp.eq.s32.totalorder %s173, 0
    %s176 = sadd.s32 %s175, 1
    %s177 = scalar_select %p174, %s175, %s176
    %p180 = pneg %p174
    %p181 = scmp.eq.s32.totalorder %s13, 1
    %p182 = por %p180, %p181
    %p183 = scmp.ne.s32.totalorder %s175, %s178
    %p184 = scmp.eq.s32.totalorder %s13, 0
    %p185 = por %p183, %p184
    %p186 = scmp.ne.s32.totalorder %s175, %s178
    %p187 = scmp.eq.s32.totalorder %s18, 1
    %p188 = por %p186, %p187
    %p189 = scmp.ne.s32.totalorder %s178, %s179
    %p190 = scmp.eq.s32.totalorder %s18, 0
    %p191 = por %p189, %p190
    %p192 = scmp.ne.s32.totalorder %s178, %s179
    %p193 = scmp.eq.s32.totalorder %s19, 1
    %p194 = por %p192, %p193
    %p196 = scmp.ne.s32.totalorder %s179, %s195
    %p197 = scmp.eq.s32.totalorder %s19, 0
    %p198 = por %p196, %p197
    %p199 = scmp.le.s32.totalorder 1, %s13
    %p200 = scmp.lt.s32.totalorder %s13, 3
    %p201 = pnand %p199, %p200
    %p202 = pneg %p201
    // Predicated region
    $region9: #{block_forward.1} parent=5 // pred_check
      _
    $region10: #{block_forward.1} parent=5 // pred_check_branch
      %204 = sbr.rel (%p201) target = $region12
    $region11: #{block_forward.1} parent=5 // pred_region
      %s205 = ssub.s32 %s13, 1
      // Predicated region
      $region13: #{block_forward.1} parent=11 // pred_check
        %p206 = pneg %p60
      $region14: #{block_forward.1} parent=11 // pred_check_branch
        %208 = sbr.rel (%p206) target = $region16
      $region15: #{block_forward.1} parent=11 // pred_region
        _
      $region16: #{block_forward.1} parent=11 // pred_fallthru
        _
      // Predicated region
      $region17: #{block_forward.1} parent=11 // pred_check
        %p209 = pneg %p81
      $region18: #{block_forward.1} parent=11 // pred_check_branch
        %211 = sbr.rel (%p209) target = $region20
      $region19: #{block_forward.1} parent=11 // pred_region
        _
      $region20: #{block_forward.1} parent=11 // pred_fallthru
        _
      // Predicated region
      $region21: #{block_forward.1} parent=11 // pred_check
        %p212 = pneg %p102
      $region22: #{block_forward.1} parent=11 // pred_check_branch
        %214 = sbr.rel (%p212) target = $region24
      $region23: #{block_forward.1} parent=11 // pred_region
        _
      $region24: #{block_forward.1} parent=11 // pred_fallthru
        _
      // Predicated region
      $region25: #{block_forward.1} parent=11 // pred_check
        %p215 = pneg %p123
      $region26: #{block_forward.1} parent=11 // pred_check_branch
        %217 = sbr.rel (%p215) target = $region28
      $region27: #{block_forward.1} parent=11 // pred_region
        _
      $region28: #{block_forward.1} parent=11 // pred_fallthru
        _
      // Predicated region
      $region29: #{block_forward.1} parent=11 // pred_check
        %p218 = pneg %p144
      $region30: #{block_forward.1} parent=11 // pred_check_branch
        %220 = sbr.rel (%p218) target = $region32
      $region31: #{block_forward.1} parent=11 // pred_region
        _
      $region32: #{block_forward.1} parent=11 // pred_fallthru
        _
      // Predicated region
      $region33: #{block_forward.1} parent=11 // pred_check
        %p221 = pneg %p165
      $region34: #{block_forward.1} parent=11 // pred_check_branch
        %223 = sbr.rel (%p221) target = $region36
      $region35: #{block_forward.1} parent=11 // pred_region
        _
      $region36: #{block_forward.1} parent=11 // pred_fallthru
        _
    $region12: #{block_forward.1} parent=5 // pred_fallthru
      _
    %p224 = scmp.lt.s32.totalorder %s13, 2
    // Predicated region
    $region37: #{block_forward.1} parent=5 // pred_check
      %p225 = pneg %p224
    $region38: #{block_forward.1} parent=5 // pred_check_branch
      %227 = sbr.rel (%p225) target = $region40
    $region39: #{block_forward.1} parent=5 // pred_region
      // Predicated region
      $region41: #{block_forward.1} parent=39 // pred_check
        %p228 = pneg %p33
      $region42: #{block_forward.1} parent=39 // pred_check_branch
        %230 = sbr.rel (%p228) target = $region44
      $region43: #{block_forward.1} parent=39 // pred_region
        %p231 = scmp.lt.s32.totalorder %s13, 1
        %s232 = scalar_select %p231, %s13, 1
        %s233 = smul.addr %s232, 8
        %s234 = smul.addr %s233, 8
        %s235 = scalar_lea.vmem %s0, %s234
      $region44: #{block_forward.1} parent=39 // pred_fallthru
        _
    $region40: #{block_forward.1} parent=5 // pred_fallthru
      _
    %p236 = scmp.le.s32.totalorder 1, %s13
    %p237 = scmp.lt.s32.totalorder %s13, 3
    %p238 = pnand %p236, %p237
    %p239 = pneg %p238
    // Predicated region
    $region45: #{block_forward.1} parent=5 // pred_check
      _
    $region46: #{block_forward.1} parent=5 // pred_check_branch
      %241 = sbr.rel (%p238) target = $region48
    $region47: #{block_forward.1} parent=5 // pred_region
      %s242 = ssub.s32 %s13, 1
      %p243 = scmp.lt.s32.totalorder %s18, 1
      %s244 = scalar_select %p243, %s18, 1
      %s245 = smul.addr %s244, 8
      %s246 = smul.addr %s245, 8
      %s247 = scalar_lea.vmem %s0, %s246
      %p248 = pneg %p39
      %p249 = pneg %p36
      %p250 = pneg %p60
      %p251 = pneg %p57
      %p252 = pneg %p81
      %p253 = pneg %p78
      %p254 = pneg %p102
      %p255 = pneg %p99
      %p256 = pneg %p123
      %p257 = pneg %p120
      %p258 = pneg %p144
      %p259 = pneg %p141
      %p260 = pneg %p165
      %p261 = pneg %p162
      %p262 = pneg %p191
      %p263 = pneg %p188
      %p264 = scmp.lt.s32.totalorder %s18, 1
      %s265 = scalar_select %p264, %s18, 1
      %s266 = smul.addr %s265, 8
      %s267 = scalar_lea.vmem %s7, %s266
      %p268 = scmp.lt.s32.totalorder %s18, 1
      %s269 = scalar_select %p268, %s18, 1
      %s270 = smul.addr %s269, 8
      %s271 = smul.addr %s270, 8
      %s272 = scalar_lea.vmem %s0, %s271
      %p273 = scmp.lt.s32.totalorder %s18, 1
      %s274 = scalar_select %p273, %s18, 1
      %s275 = smul.addr %s274, 8
      %s276 = scalar_lea.vmem %s7, %s275
      %vm277 = vcmask 516096
      %278 = vst.msk [vmem:[#allocation2] sm:$0x1] %vm277, 0.0
      %279 = vst.msk [vmem:[#allocation2 + $0x11] sm:$0x1] %vm277, 0.0
      %280 = vst [vmem:[#allocation3] sm:$0x1] 0.0
      %281 = vst [vmem:[#allocation3 + $0x11] sm:$0x1] 0.0
      %282 = vst.msk [vmem:[#allocation4] sm:$0x1] %vm277, 0.0
      %283 = vst.msk [vmem:[#allocation4 + $0x9] sm:$0x1] %vm277, 0.0
      %v284 = vld [vmem:[%s272] sm:$0xff]
      %v285 = vld [vmem:[%s272 + $0x8] sm:$0xff]
      %s286 = scalar_lea.vmem %s272, 16
      %v287 = vld [vmem:[%s286] sm:$0xff]
      %v288 = vld [vmem:[%s286 + $0x8] sm:$0xff]
      %s289 = scalar_lea.vmem %s272, 32
      %v290 = vld [vmem:[%s289] sm:$0xff]
      %v291 = vld [vmem:[%s289 + $0x8] sm:$0xff]
      %s292 = scalar_lea.vmem %s272, 48
      %v293 = vld [vmem:[%s292] sm:$0xff]
      %v294 = vld [vmem:[%s292 + $0x8] sm:$0xff]
      %297 = vrot.lane.b32.xlu0 %v287, 16
      %v298 = vpop.permute.xlu0 %297
      %299 = vrot.lane.b32.xlu0 %v288, 16
      %v300 = vpop.permute.xlu0 %299
      %305 = vrot.lane.b32.xlu0 %v290, 32
      %v306 = vpop.permute.xlu0 %305
      %307 = vrot.lane.b32.xlu0 %v291, 32
      %v308 = vpop.permute.xlu0 %307
      %313 = vrot.lane.b32.xlu0 %v293, 48
      %v314 = vpop.permute.xlu0 %313
      %315 = vrot.lane.b32.xlu0 %v294, 48
      %v316 = vpop.permute.xlu0 %315
      %vm319 = vcmask 130048
      %v320 = vsel %vm319, %v284, %v298
      %v321 = vsel %vm319, %v285, %v300
      %vm322 = vcmask 261120
      %v323 = vsel %vm322, %v320, %v306
      %v324 = vsel %vm322, %v321, %v308
      %vm325 = vcmask 392192
      %v326 = vsel %vm325, %v323, %v314
      %v327 = vsel %vm325, %v324, %v316
      %vm328 = vcmask 523264
      %329 = vst.msk [vmem:[#allocation2 + $0x1] sm:$0xff] %vm328, %v326
      %330 = vst.msk [vmem:[#allocation2 + $0x9] sm:$0xff] %vm328, %v327
      %v331 = vld [vmem:[#allocation2] sm:$0xff]
      %v332 = vld [vmem:[#allocation2 + $0x8] sm:$0xff]
      %v333 = vld [vmem:[%s1] sm:$0xff]
      %v334 = vld [vmem:[%s1 + $0x8] sm:$0xff]
      %v335 = vld [vmem:[%s1 + $0x10] sm:$0xff]
      %v336 = vld [vmem:[%s1 + $0x18] sm:$0xff]
      %v337 = vld [vmem:[%s1 + $0x20] sm:$0xff]
      %v338 = vld [vmem:[%s1 + $0x28] sm:$0xff]
      %v339 = vld [vmem:[%s1 + $0x30] sm:$0xff]
      %v340 = vld [vmem:[%s1 + $0x38] sm:$0xff]
      %v341 = vld [vmem:[#allocation2 + $0x1] sm:$0xff]
      %v342 = vld [vmem:[#allocation2 + $0x9] sm:$0xff]
      %s343 = scalar_lea.vmem %s1, 64
      %v344 = vld [vmem:[%s343] sm:$0xff]
      %v345 = vld [vmem:[%s343 + $0x8] sm:$0xff]
      %v346 = vld [vmem:[%s343 + $0x10] sm:$0xff]
      %v347 = vld [vmem:[%s343 + $0x18] sm:$0xff]
      %v348 = vld [vmem:[%s343 + $0x20] sm:$0xff]
      %v349 = vld [vmem:[%s343 + $0x28] sm:$0xff]
      %v350 = vld [vmem:[%s343 + $0x30] sm:$0xff]
      %v351 = vld [vmem:[%s343 + $0x38] sm:$0xff]
      %v353 = vsel %vm328, %v341, 0
      %v356 = vsel %vm328, %v342, 0
      %358 = vmatprep.subr.mxu0 0.0
      %359 = vmatpush1.msra.mxu0 0.0
      %360 = vmatprep.subr.mxu0 0.0
      %361 = vmatpush1.msra.mxu0 0.0
      %362 = vmatprep.subr.mxu0 0.0
      %363 = vmatpush1.msra.mxu0 0.0
      %364 = vmatprep.subr.mxu0 0.0
      %365 = vmatpush1.msra.mxu0 0.0
      %366 = vmatprep.subr.mxu0 0.0
      %367 = vmatpush1.msra.mxu0 0.0
      %368 = vmatprep.subr.mxu0 0.0
      %369 = vmatpush1.msra.mxu0 0.0
      %370 = vmatprep.subr.mxu0 0.0
      %371 = vmatpush1.msra.mxu0 0.0
      %372 = vmatprep.subr.mxu0 0.0
      %373 = vmatpush1.msra.mxu0 0.0
      %374 = vmatprep.subr.mxu0 0.0
      %375 = vmatpush1.msra.mxu0 %v351
      %376 = vmatprep.subr.mxu0 0.0
      %377 = vmatpush1.msra.mxu0 %v350
      %378 = vmatprep.subr.mxu0 0.0
      %379 = vmatpush1.msra.mxu0 %v349
      %380 = vmatprep.subr.mxu0 0.0
      %381 = vmatpush1.msra.mxu0 %v348
      %382 = vmatprep.subr.mxu0 0.0
      %383 = vmatpush1.msra.mxu0 %v347
      %384 = vmatprep.subr.mxu0 0.0
      %385 = vmatpush1.msra.mxu0 %v346
      %386 = vmatprep.subr.mxu0 0.0
      %387 = vmatpush1.msra.mxu0 %v345
      %388 = vmatprep.subr.mxu0 0.0
      %389 = vmatpush1.msra.mxu0 %v344
      %390 = vmatprep.subr.mxu0 0.0
      %391 = vmatpush2.msra.mxu0 0.0
      %392 = vmatprep.subr.mxu0 0.0
      %393 = vmatpush2.msra.mxu0 0.0
      %394 = vmatprep.subr.mxu0 0.0
      %395 = vmatpush2.msra.mxu0 0.0
      %396 = vmatprep.subr.mxu0 0.0
      %397 = vmatpush2.msra.mxu0 0.0
      %398 = vmatprep.subr.mxu0 0.0
      %399 = vmatpush2.msra.mxu0 0.0
      %400 = vmatprep.subr.mxu0 0.0
      %401 = vmatpush2.msra.mxu0 0.0
      %402 = vmatprep.subr.mxu0 0.0
      %403 = vmatpush2.msra.mxu0 0.0
      %404 = vmatprep.subr.mxu0 0.0
      %405 = vmatpush2.msra.mxu0 0.0
      %406 = vmatprep.subr.mxu0 0.0
      %407 = vmatpush2.msra.mxu0 0.0
      %408 = vmatprep.subr.mxu0 0.0
      %409 = vmatpush2.msra.mxu0 0.0
      %410 = vmatprep.subr.mxu0 0.0
      %411 = vmatpush2.msra.mxu0 0.0
      %412 = vmatprep.subr.mxu0 0.0
      %413 = vmatpush2.msra.mxu0 0.0
      %414 = vmatprep.subr.mxu0 0.0
      %415 = vmatpush2.msra.mxu0 0.0
      %416 = vmatprep.subr.mxu0 0.0
      %417 = vmatpush2.msra.mxu0 0.0
      %418 = vmatprep.subr.mxu0 0.0
      %419 = vmatpush2.msra.mxu0 0.0
      %420 = vmatprep.subr.mxu0 0.0
      %421 = vmatpush2.msra.mxu0 0.0
      %422 = vmatprep.mubr.f32.mxu0 0.0
      %423 = vmatmul.mubr.f32.gmra.mxu0 %v353
      %v424 = vpop.f32.mrf.mxu0
      %v425 = vadd.f32 0.0, %v424
      %v426 = vpop.f32.mrf.mxu0
      %427 = vmatprep.mubr.f32.mxu0 0.0
      %428 = vmatmul.mubr.f32.gmra.mxu0 %v356
      %v429 = vpop.f32.mrf.mxu0
      %v430 = vadd.f32 0.0, %v429
      %v431 = vpop.f32.mrf.mxu0
      %432 = vdwg.mxu0
      %v434 = vsel %vm328, %v331, 0
      %v437 = vsel %vm328, %v332, 0
      %439 = vmatprep.subr.mxu0 0.0
      %440 = vmatpush1.msra.mxu0 0.0
      %441 = vmatprep.subr.mxu0 0.0
      %442 = vmatpush1.msra.mxu0 0.0
      %443 = vmatprep.subr.mxu0 0.0
      %444 = vmatpush1.msra.mxu0 0.0
      %445 = vmatprep.subr.mxu0 0.0
      %446 = vmatpush1.msra.mxu0 0.0
      %447 = vmatprep.subr.mxu0 0.0
      %448 = vmatpush1.msra.mxu0 0.0
      %449 = vmatprep.subr.mxu0 0.0
      %450 = vmatpush1.msra.mxu0 0.0
      %451 = vmatprep.subr.mxu0 0.0
      %452 = vmatpush1.msra.mxu0 0.0
      %453 = vmatprep.subr.mxu0 0.0
      %454 = vmatpush1.msra.mxu0 0.0
      %455 = vmatprep.subr.mxu0 0.0
      %456 = vmatpush1.msra.mxu0 %v340
      %457 = vmatprep.subr.mxu0 0.0
      %458 = vmatpush1.msra.mxu0 %v339
      %459 = vmatprep.subr.mxu0 0.0
      %460 = vmatpush1.msra.mxu0 %v338
      %461 = vmatprep.subr.mxu0 0.0
      %462 = vmatpush1.msra.mxu0 %v337
      %463 = vmatprep.subr.mxu0 0.0
      %464 = vmatpush1.msra.mxu0 %v336
      %465 = vmatprep.subr.mxu0 0.0
      %466 = vmatpush1.msra.mxu0 %v335
      %467 = vmatprep.subr.mxu0 0.0
      %468 = vmatpush1.msra.mxu0 %v334
      %469 = vmatprep.subr.mxu0 0.0
      %470 = vmatpush1.msra.mxu0 %v333
      %471 = vmatprep.subr.mxu0 0.0
      %472 = vmatpush2.msra.mxu0 0.0
      %473 = vmatprep.subr.mxu0 0.0
      %474 = vmatpush2.msra.mxu0 0.0
      %475 = vmatprep.subr.mxu0 0.0
      %476 = vmatpush2.msra.mxu0 0.0
      %477 = vmatprep.subr.mxu0 0.0
      %478 = vmatpush2.msra.mxu0 0.0
      %479 = vmatprep.subr.mxu0 0.0
      %480 = vmatpush2.msra.mxu0 0.0
      %481 = vmatprep.subr.mxu0 0.0
      %482 = vmatpush2.msra.mxu0 0.0
      %483 = vmatprep.subr.mxu0 0.0
      %484 = vmatpush2.msra.mxu0 0.0
      %485 = vmatprep.subr.mxu0 0.0
      %486 = vmatpush2.msra.mxu0 0.0
      %487 = vmatprep.subr.mxu0 0.0
      %488 = vmatpush2.msra.mxu0 0.0
      %489 = vmatprep.subr.mxu0 0.0
      %490 = vmatpush2.msra.mxu0 0.0
      %491 = vmatprep.subr.mxu0 0.0
      %492 = vmatpush2.msra.mxu0 0.0
      %493 = vmatprep.subr.mxu0 0.0
      %494 = vmatpush2.msra.mxu0 0.0
      %495 = vmatprep.subr.mxu0 0.0
      %496 = vmatpush2.msra.mxu0 0.0
      %497 = vmatprep.subr.mxu0 0.0
      %498 = vmatpush2.msra.mxu0 0.0
      %499 = vmatprep.subr.mxu0 0.0
      %500 = vmatpush2.msra.mxu0 0.0
      %501 = vmatprep.subr.mxu0 0.0
      %502 = vmatpush2.msra.mxu0 0.0
      %503 = vmatprep.mubr.f32.mxu0 0.0
      %504 = vmatmul.mubr.f32.gmra.mxu0 %v434
      %v505 = vpop.f32.mrf.mxu0
      %v506 = vadd.f32 %v425, %v505
      %v507 = vpop.f32.mrf.mxu0
      %508 = vmatprep.mubr.f32.mxu0 0.0
      %509 = vmatmul.mubr.f32.gmra.mxu0 %v437
      %v510 = vpop.f32.mrf.mxu0
      %v511 = vadd.f32 %v430, %v510
      %v512 = vpop.f32.mrf.mxu0
      %513 = vdwg.mxu0
      %v514 = vld [vmem:[#allocation2 + $0x2] sm:$0xff]
      %v515 = vld [vmem:[#allocation2 + $0xa] sm:$0xff]
      %s516 = scalar_lea.vmem %s1, 128
      %v517 = vld [vmem:[%s516] sm:$0xff]
      %v518 = vld [vmem:[%s516 + $0x8] sm:$0xff]
      %v519 = vld [vmem:[%s516 + $0x10] sm:$0xff]
      %v520 = vld [vmem:[%s516 + $0x18] sm:$0xff]
      %v521 = vld [vmem:[%s516 + $0x20] sm:$0xff]
      %v522 = vld [vmem:[%s516 + $0x28] sm:$0xff]
      %v523 = vld [vmem:[%s516 + $0x30] sm:$0xff]
      %v524 = vld [vmem:[%s516 + $0x38] sm:$0xff]
      %v526 = vsel %vm328, %v514, 0
      %v529 = vsel %vm328, %v515, 0
      %531 = vmatprep.subr.mxu0 0.0
      %532 = vmatpush1.msra.mxu0 0.0
      %533 = vmatprep.subr.mxu0 0.0
      %534 = vmatpush1.msra.mxu0 0.0
      %535 = vmatprep.subr.mxu0 0.0
      %536 = vmatpush1.msra.mxu0 0.0
      %537 = vmatprep.subr.mxu0 0.0
      %538 = vmatpush1.msra.mxu0 0.0
      %539 = vmatprep.subr.mxu0 0.0
      %540 = vmatpush1.msra.mxu0 0.0
      %541 = vmatprep.subr.mxu0 0.0
      %542 = vmatpush1.msra.mxu0 0.0
      %543 = vmatprep.subr.mxu0 0.0
      %544 = vmatpush1.msra.mxu0 0.0
      %545 = vmatprep.subr.mxu0 0.0
      %546 = vmatpush1.msra.mxu0 0.0
      %547 = vmatprep.subr.mxu0 0.0
      %548 = vmatpush1.msra.mxu0 %v524
      %549 = vmatprep.subr.mxu0 0.0
      %550 = vmatpush1.msra.mxu0 %v523
      %551 = vmatprep.subr.mxu0 0.0
      %552 = vmatpush1.msra.mxu0 %v522
      %553 = vmatprep.subr.mxu0 0.0
      %554 = vmatpush1.msra.mxu0 %v521
      %555 = vmatprep.subr.mxu0 0.0
      %556 = vmatpush1.msra.mxu0 %v520
      %557 = vmatprep.subr.mxu0 0.0
      %558 = vmatpush1.msra.mxu0 %v519
      %559 = vmatprep.subr.mxu0 0.0
      %560 = vmatpush1.msra.mxu0 %v518
      %561 = vmatprep.subr.mxu0 0.0
      %562 = vmatpush1.msra.mxu0 %v517
      %563 = vmatprep.subr.mxu0 0.0
      %564 = vmatpush2.msra.mxu0 0.0
      %565 = vmatprep.subr.mxu0 0.0
      %566 = vmatpush2.msra.mxu0 0.0
      %567 = vmatprep.subr.mxu0 0.0
      %568 = vmatpush2.msra.mxu0 0.0
      %569 = vmatprep.subr.mxu0 0.0
      %570 = vmatpush2.msra.mxu0 0.0
      %571 = vmatprep.subr.mxu0 0.0
      %572 = vmatpush2.msra.mxu0 0.0
      %573 = vmatprep.subr.mxu0 0.0
      %574 = vmatpush2.msra.mxu0 0.0
      %575 = vmatprep.subr.mxu0 0.0
      %576 = vmatpush2.msra.mxu0 0.0
      %577 = vmatprep.subr.mxu0 0.0
      %578 = vmatpush2.msra.mxu0 0.0
      %579 = vmatprep.subr.mxu0 0.0
      %580 = vmatpush2.msra.mxu0 0.0
      %581 = vmatprep.subr.mxu0 0.0
      %582 = vmatpush2.msra.mxu0 0.0
      %583 = vmatprep.subr.mxu0 0.0
      %584 = vmatpush2.msra.mxu0 0.0
      %585 = vmatprep.subr.mxu0 0.0
      %586 = vmatpush2.msra.mxu0 0.0
      %587 = vmatprep.subr.mxu0 0.0
      %588 = vmatpush2.msra.mxu0 0.0
      %589 = vmatprep.subr.mxu0 0.0
      %590 = vmatpush2.msra.mxu0 0.0
      %591 = vmatprep.subr.mxu0 0.0
      %592 = vmatpush2.msra.mxu0 0.0
      %593 = vmatprep.subr.mxu0 0.0
      %594 = vmatpush2.msra.mxu0 0.0
      %595 = vmatprep.mubr.f32.mxu0 0.0
      %596 = vmatmul.mubr.f32.gmra.mxu0 %v526
      %v597 = vpop.f32.mrf.mxu0
      %v598 = vadd.f32 0.0, %v597
      %v599 = vpop.f32.mrf.mxu0
      %600 = vmatprep.mubr.f32.mxu0 0.0
      %601 = vmatmul.mubr.f32.gmra.mxu0 %v529
      %v602 = vpop.f32.mrf.mxu0
      %v603 = vadd.f32 0.0, %v602
      %v604 = vpop.f32.mrf.mxu0
      %605 = vdwg.mxu0
      %v606 = vadd.f32 %v506, %v598
      %v607 = vadd.f32 %v511, %v603
      %v608 = vld [vmem:[%s2] sm:$0x1]
      %v610 = vlaneseq
      %v611 = vshrl.u32 %v610, 7
      %v612 = vsub.s32 0, %v611
      %v613 = vrot.slane %v608, %v612
      %v615 = vadd.f32 %v606, %v613
      %v616 = vadd.f32 %v607, %v613
      %v617 = vmax.f32 %v615, 0.0
      %v618 = vmax.f32 %v616, 0.0
      %619 = vst [vmem:[#allocation3 + $0x1] sm:$0xff] %v617
      %620 = vst [vmem:[#allocation3 + $0x9] sm:$0xff] %v618
      %v621 = vld [vmem:[#allocation3] ss:$2 sm:$0xff]
      %v622 = vld [vmem:[%s3] sm:$0xff]
      %v623 = vld [vmem:[%s3 + $0x8] sm:$0xff]
      %v624 = vld [vmem:[%s3 + $0x10] sm:$0xff]
      %v625 = vld [vmem:[%s3 + $0x18] sm:$0xff]
      %v626 = vld [vmem:[%s3 + $0x20] sm:$0xff]
      %v627 = vld [vmem:[%s3 + $0x28] sm:$0xff]
      %v628 = vld [vmem:[%s3 + $0x30] sm:$0xff]
      %v629 = vld [vmem:[%s3 + $0x38] sm:$0xff]
      %v630 = vld [vmem:[%s3 + $0x40] sm:$0xff]
      %v631 = vld [vmem:[%s3 + $0x48] sm:$0xff]
      %v632 = vld [vmem:[%s3 + $0x50] sm:$0xff]
      %v633 = vld [vmem:[%s3 + $0x58] sm:$0xff]
      %v634 = vld [vmem:[%s3 + $0x60] sm:$0xff]
      %v635 = vld [vmem:[%s3 + $0x68] sm:$0xff]
      %v636 = vld [vmem:[%s3 + $0x70] sm:$0xff]
      %v637 = vld [vmem:[%s3 + $0x78] sm:$0xff]
      %s638 = scalar_lea.vmem [#allocation3], 1
      %v639 = vld [vmem:[%s638] ss:$2 sm:$0xff]
      %s640 = scalar_lea.vmem %s3, 128
      %v641 = vld [vmem:[%s640] sm:$0xff]
      %v642 = vld [vmem:[%s640 + $0x8] sm:$0xff]
      %v643 = vld [vmem:[%s640 + $0x10] sm:$0xff]
      %v644 = vld [vmem:[%s640 + $0x18] sm:$0xff]
      %v645 = vld [vmem:[%s640 + $0x20] sm:$0xff]
      %v646 = vld [vmem:[%s640 + $0x28] sm:$0xff]
      %v647 = vld [vmem:[%s640 + $0x30] sm:$0xff]
      %v648 = vld [vmem:[%s640 + $0x38] sm:$0xff]
      %v649 = vld [vmem:[%s640 + $0x40] sm:$0xff]
      %v650 = vld [vmem:[%s640 + $0x48] sm:$0xff]
      %v651 = vld [vmem:[%s640 + $0x50] sm:$0xff]
      %v652 = vld [vmem:[%s640 + $0x58] sm:$0xff]
      %v653 = vld [vmem:[%s640 + $0x60] sm:$0xff]
      %v654 = vld [vmem:[%s640 + $0x68] sm:$0xff]
      %v655 = vld [vmem:[%s640 + $0x70] sm:$0xff]
      %v656 = vld [vmem:[%s640 + $0x78] sm:$0xff]
      %657 = vmatprep.subr.mxu0 0.0
      %658 = vmatpush1.msra.mxu0 %v656
      %659 = vmatprep.subr.mxu0 0.0
      %660 = vmatpush1.msra.mxu0 %v655
      %661 = vmatprep.subr.mxu0 0.0
      %662 = vmatpush1.msra.mxu0 %v654
      %663 = vmatprep.subr.mxu0 0.0
      %664 = vmatpush1.msra.mxu0 %v653
      %665 = vmatprep.subr.mxu0 0.0
      %666 = vmatpush1.msra.mxu0 %v652
      %667 = vmatprep.subr.mxu0 0.0
      %668 = vmatpush1.msra.mxu0 %v651
      %669 = vmatprep.subr.mxu0 0.0
      %670 = vmatpush1.msra.mxu0 %v650
      %671 = vmatprep.subr.mxu0 0.0
      %672 = vmatpush1.msra.mxu0 %v649
      %673 = vmatprep.subr.mxu0 0.0
      %674 = vmatpush1.msra.mxu0 %v648
      %675 = vmatprep.subr.mxu0 0.0
      %676 = vmatpush1.msra.mxu0 %v647
      %677 = vmatprep.subr.mxu0 0.0
      %678 = vmatpush1.msra.mxu0 %v646
      %679 = vmatprep.subr.mxu0 0.0
      %680 = vmatpush1.msra.mxu0 %v645
      %681 = vmatprep.subr.mxu0 0.0
      %682 = vmatpush1.msra.mxu0 %v644
      %683 = vmatprep.subr.mxu0 0.0
      %684 = vmatpush1.msra.mxu0 %v643
      %685 = vmatprep.subr.mxu0 0.0
      %686 = vmatpush1.msra.mxu0 %v642
      %687 = vmatprep.subr.mxu0 0.0
      %688 = vmatpush1.msra.mxu0 %v641
      %689 = vmatprep.subr.mxu0 0.0
      %690 = vmatpush2.msra.mxu0 0.0
      %691 = vmatprep.subr.mxu0 0.0
      %692 = vmatpush2.msra.mxu0 0.0
      %693 = vmatprep.subr.mxu0 0.0
      %694 = vmatpush2.msra.mxu0 0.0
      %695 = vmatprep.subr.mxu0 0.0
      %696 = vmatpush2.msra.mxu0 0.0
      %697 = vmatprep.subr.mxu0 0.0
      %698 = vmatpush2.msra.mxu0 0.0
      %699 = vmatprep.subr.mxu0 0.0
      %700 = vmatpush2.msra.mxu0 0.0
      %701 = vmatprep.subr.mxu0 0.0
      %702 = vmatpush2.msra.mxu0 0.0
      %703 = vmatprep.subr.mxu0 0.0
      %704 = vmatpush2.msra.mxu0 0.0
      %705 = vmatprep.subr.mxu0 0.0
      %706 = vmatpush2.msra.mxu0 0.0
      %707 = vmatprep.subr.mxu0 0.0
      %708 = vmatpush2.msra.mxu0 0.0
      %709 = vmatprep.subr.mxu0 0.0
      %710 = vmatpush2.msra.mxu0 0.0
      %711 = vmatprep.subr.mxu0 0.0
      %712 = vmatpush2.msra.mxu0 0.0
      %713 = vmatprep.subr.mxu0 0.0
      %714 = vmatpush2.msra.mxu0 0.0
      %715 = vmatprep.subr.mxu0 0.0
      %716 = vmatpush2.msra.mxu0 0.0
      %717 = vmatprep.subr.mxu0 0.0
      %718 = vmatpush2.msra.mxu0 0.0
      %719 = vmatprep.subr.mxu0 0.0
      %720 = vmatpush2.msra.mxu0 0.0
      %721 = vmatprep.mubr.f32.mxu0 0.0
      %722 = vmatmul.mubr.f32.gmra.mxu0 %v639
      %v723 = vpop.f32.mrf.mxu0
      %v724 = vadd.f32 0.0, %v723
      %v725 = vpop.f32.mrf.mxu0
      %726 = vdwg.mxu0
      %727 = vmatprep.subr.mxu0 0.0
      %728 = vmatpush1.msra.mxu0 %v637
      %729 = vmatprep.subr.mxu0 0.0
      %730 = vmatpush1.msra.mxu0 %v636
      %731 = vmatprep.subr.mxu0 0.0
      %732 = vmatpush1.msra.mxu0 %v635
      %733 = vmatprep.subr.mxu0 0.0
      %734 = vmatpush1.msra.mxu0 %v634
      %735 = vmatprep.subr.mxu0 0.0
      %736 = vmatpush1.msra.mxu0 %v633
      %737 = vmatprep.subr.mxu0 0.0
      %738 = vmatpush1.msra.mxu0 %v632
      %739 = vmatprep.subr.mxu0 0.0
      %740 = vmatpush1.msra.mxu0 %v631
      %741 = vmatprep.subr.mxu0 0.0
      %742 = vmatpush1.msra.mxu0 %v630
      %743 = vmatprep.subr.mxu0 0.0
      %744 = vmatpush1.msra.mxu0 %v629
      %745 = vmatprep.subr.mxu0 0.0
      %746 = vmatpush1.msra.mxu0 %v628
      %747 = vmatprep.subr.mxu0 0.0
      %748 = vmatpush1.msra.mxu0 %v627
      %749 = vmatprep.subr.mxu0 0.0
      %750 = vmatpush1.msra.mxu0 %v626
      %751 = vmatprep.subr.mxu0 0.0
      %752 = vmatpush1.msra.mxu0 %v625
      %753 = vmatprep.subr.mxu0 0.0
      %754 = vmatpush1.msra.mxu0 %v624
      %755 = vmatprep.subr.mxu0 0.0
      %756 = vmatpush1.msra.mxu0 %v623
      %757 = vmatprep.subr.mxu0 0.0
      %758 = vmatpush1.msra.mxu0 %v622
      %759 = vmatprep.subr.mxu0 0.0
      %760 = vmatpush2.msra.mxu0 0.0
      %761 = vmatprep.subr.mxu0 0.0
      %762 = vmatpush2.msra.mxu0 0.0
      %763 = vmatprep.subr.mxu0 0.0
      %764 = vmatpush2.msra.mxu0 0.0
      %765 = vmatprep.subr.mxu0 0.0
      %766 = vmatpush2.msra.mxu0 0.0
      %767 = vmatprep.subr.mxu0 0.0
      %768 = vmatpush2.msra.mxu0 0.0
      %769 = vmatprep.subr.mxu0 0.0
      %770 = vmatpush2.msra.mxu0 0.0
      %771 = vmatprep.subr.mxu0 0.0
      %772 = vmatpush2.msra.mxu0 0.0
      %773 = vmatprep.subr.mxu0 0.0
      %774 = vmatpush2.msra.mxu0 0.0
      %775 = vmatprep.subr.mxu0 0.0
      %776 = vmatpush2.msra.mxu0 0.0
      %777 = vmatprep.subr.mxu0 0.0
      %778 = vmatpush2.msra.mxu0 0.0
      %779 = vmatprep.subr.mxu0 0.0
      %780 = vmatpush2.msra.mxu0 0.0
      %781 = vmatprep.subr.mxu0 0.0
      %782 = vmatpush2.msra.mxu0 0.0
      %783 = vmatprep.subr.mxu0 0.0
      %784 = vmatpush2.msra.mxu0 0.0
      %785 = vmatprep.subr.mxu0 0.0
      %786 = vmatpush2.msra.mxu0 0.0
      %787 = vmatprep.subr.mxu0 0.0
      %788 = vmatpush2.msra.mxu0 0.0
      %789 = vmatprep.subr.mxu0 0.0
      %790 = vmatpush2.msra.mxu0 0.0
      %791 = vmatprep.mubr.f32.mxu0 0.0
      %792 = vmatmul.mubr.f32.gmra.mxu0 %v621
      %v793 = vpop.f32.mrf.mxu0
      %v794 = vadd.f32 %v724, %v793
      %v795 = vpop.f32.mrf.mxu0
      %796 = vdwg.mxu0
      %s797 = scalar_lea.vmem [#allocation3], 2
      %v798 = vld [vmem:[%s797] ss:$2 sm:$0xff]
      %s799 = scalar_lea.vmem %s3, 256
      %v800 = vld [vmem:[%s799] sm:$0xff]
      %v801 = vld [vmem:[%s799 + $0x8] sm:$0xff]
      %v802 = vld [vmem:[%s799 + $0x10] sm:$0xff]
      %v803 = vld [vmem:[%s799 + $0x18] sm:$0xff]
      %v804 = vld [vmem:[%s799 + $0x20] sm:$0xff]
      %v805 = vld [vmem:[%s799 + $0x28] sm:$0xff]
      %v806 = vld [vmem:[%s799 + $0x30] sm:$0xff]
      %v807 = vld [vmem:[%s799 + $0x38] sm:$0xff]
      %v808 = vld [vmem:[%s799 + $0x40] sm:$0xff]
      %v809 = vld [vmem:[%s799 + $0x48] sm:$0xff]
      %v810 = vld [vmem:[%s799 + $0x50] sm:$0xff]
      %v811 = vld [vmem:[%s799 + $0x58] sm:$0xff]
      %v812 = vld [vmem:[%s799 + $0x60] sm:$0xff]
      %v813 = vld [vmem:[%s799 + $0x68] sm:$0xff]
      %v814 = vld [vmem:[%s799 + $0x70] sm:$0xff]
      %v815 = vld [vmem:[%s799 + $0x78] sm:$0xff]
      %816 = vmatprep.subr.mxu0 0.0
      %817 = vmatpush1.msra.mxu0 %v815
      %818 = vmatprep.subr.mxu0 0.0
      %819 = vmatpush1.msra.mxu0 %v814
      %820 = vmatprep.subr.mxu0 0.0
      %821 = vmatpush1.msra.mxu0 %v813
      %822 = vmatprep.subr.mxu0 0.0
      %823 = vmatpush1.msra.mxu0 %v812
      %824 = vmatprep.subr.mxu0 0.0
      %825 = vmatpush1.msra.mxu0 %v811
      %826 = vmatprep.subr.mxu0 0.0
      %827 = vmatpush1.msra.mxu0 %v810
      %828 = vmatprep.subr.mxu0 0.0
      %829 = vmatpush1.msra.mxu0 %v809
      %830 = vmatprep.subr.mxu0 0.0
      %831 = vmatpush1.msra.mxu0 %v808
      %832 = vmatprep.subr.mxu0 0.0
      %833 = vmatpush1.msra.mxu0 %v807
      %834 = vmatprep.subr.mxu0 0.0
      %835 = vmatpush1.msra.mxu0 %v806
      %836 = vmatprep.subr.mxu0 0.0
      %837 = vmatpush1.msra.mxu0 %v805
      %838 = vmatprep.subr.mxu0 0.0
      %839 = vmatpush1.msra.mxu0 %v804
      %840 = vmatprep.subr.mxu0 0.0
      %841 = vmatpush1.msra.mxu0 %v803
      %842 = vmatprep.subr.mxu0 0.0
      %843 = vmatpush1.msra.mxu0 %v802
      %844 = vmatprep.subr.mxu0 0.0
      %845 = vmatpush1.msra.mxu0 %v801
      %846 = vmatprep.subr.mxu0 0.0
      %847 = vmatpush1.msra.mxu0 %v800
      %848 = vmatprep.subr.mxu0 0.0
      %849 = vmatpush2.msra.mxu0 0.0
      %850 = vmatprep.subr.mxu0 0.0
      %851 = vmatpush2.msra.mxu0 0.0
      %852 = vmatprep.subr.mxu0 0.0
      %853 = vmatpush2.msra.mxu0 0.0
      %854 = vmatprep.subr.mxu0 0.0
      %855 = vmatpush2.msra.mxu0 0.0
      %856 = vmatprep.subr.mxu0 0.0
      %857 = vmatpush2.msra.mxu0 0.0
      %858 = vmatprep.subr.mxu0 0.0
      %859 = vmatpush2.msra.mxu0 0.0
      %860 = vmatprep.subr.mxu0 0.0
      %861 = vmatpush2.msra.mxu0 0.0
      %862 = vmatprep.subr.mxu0 0.0
      %863 = vmatpush2.msra.mxu0 0.0
      %864 = vmatprep.subr.mxu0 0.0
      %865 = vmatpush2.msra.mxu0 0.0
      %866 = vmatprep.subr.mxu0 0.0
      %867 = vmatpush2.msra.mxu0 0.0
      %868 = vmatprep.subr.mxu0 0.0
      %869 = vmatpush2.msra.mxu0 0.0
      %870 = vmatprep.subr.mxu0 0.0
      %871 = vmatpush2.msra.mxu0 0.0
      %872 = vmatprep.subr.mxu0 0.0
      %873 = vmatpush2.msra.mxu0 0.0
      %874 = vmatprep.subr.mxu0 0.0
      %875 = vmatpush2.msra.mxu0 0.0
      %876 = vmatprep.subr.mxu0 0.0
      %877 = vmatpush2.msra.mxu0 0.0
      %878 = vmatprep.subr.mxu0 0.0
      %879 = vmatpush2.msra.mxu0 0.0
      %880 = vmatprep.mubr.f32.mxu0 0.0
      %881 = vmatmul.mubr.f32.gmra.mxu0 %v798
      %v882 = vpop.f32.mrf.mxu0
      %v883 = vadd.f32 0.0, %v882
      %v884 = vpop.f32.mrf.mxu0
      %885 = vdwg.mxu0
      %v886 = vadd.f32 %v794, %v883
      %v887 = vld [vmem:[%s4] sm:$0x1]
      %v889 = vlaneseq
      %v890 = vshrl.u32 %v889, 7
      %v891 = vsub.s32 0, %v890
      %v892 = vrot.slane %v887, %v891
      %v894 = vadd.f32 %v886, %v892
      %v895 = vmax.f32 %v894, 0.0
      %896 = vst.msk [vmem:[#allocation4 + $0x1] sm:$0xff] %vm328, %v895
      %v897 = vld [vmem:[#allocation4] sm:$0xff]
      %v898 = vld [vmem:[%s5] sm:$0xff]
      %v899 = vld [vmem:[%s5 + $0x8] sm:$0xff]
      %v900 = vld [vmem:[%s5 + $0x10] sm:$0xff]
      %v901 = vld [vmem:[%s5 + $0x18] sm:$0xff]
      %v902 = vld [vmem:[%s5 + $0x20] sm:$0xff]
      %v903 = vld [vmem:[%s5 + $0x28] sm:$0xff]
      %v904 = vld [vmem:[%s5 + $0x30] sm:$0xff]
      %v905 = vld [vmem:[%s5 + $0x38] sm:$0xff]
      %v906 = vld [vmem:[#allocation4 + $0x1] sm:$0xff]
      %s907 = scalar_lea.vmem %s5, 64
      %v908 = vld [vmem:[%s907] sm:$0xff]
      %v909 = vld [vmem:[%s907 + $0x8] sm:$0xff]
      %v910 = vld [vmem:[%s907 + $0x10] sm:$0xff]
      %v911 = vld [vmem:[%s907 + $0x18] sm:$0xff]
      %v912 = vld [vmem:[%s907 + $0x20] sm:$0xff]
      %v913 = vld [vmem:[%s907 + $0x28] sm:$0xff]
      %v914 = vld [vmem:[%s907 + $0x30] sm:$0xff]
      %v915 = vld [vmem:[%s907 + $0x38] sm:$0xff]
      %v917 = vsel %vm328, %v906, 0
      %919 = vmatprep.subr.mxu0 0.0
      %920 = vmatpush1.msra.mxu0 0.0
      %921 = vmatprep.subr.mxu0 0.0
      %922 = vmatpush1.msra.mxu0 0.0
      %923 = vmatprep.subr.mxu0 0.0
      %924 = vmatpush1.msra.mxu0 0.0
      %925 = vmatprep.subr.mxu0 0.0
      %926 = vmatpush1.msra.mxu0 0.0
      %927 = vmatprep.subr.mxu0 0.0
      %928 = vmatpush1.msra.mxu0 0.0
      %929 = vmatprep.subr.mxu0 0.0
      %930 = vmatpush1.msra.mxu0 0.0
      %931 = vmatprep.subr.mxu0 0.0
      %932 = vmatpush1.msra.mxu0 0.0
      %933 = vmatprep.subr.mxu0 0.0
      %934 = vmatpush1.msra.mxu0 0.0
      %935 = vmatprep.subr.mxu0 0.0
      %936 = vmatpush1.msra.mxu0 %v915
      %937 = vmatprep.subr.mxu0 0.0
      %938 = vmatpush1.msra.mxu0 %v914
      %939 = vmatprep.subr.mxu0 0.0
      %940 = vmatpush1.msra.mxu0 %v913
      %941 = vmatprep.subr.mxu0 0.0
      %942 = vmatpush1.msra.mxu0 %v912
      %943 = vmatprep.subr.mxu0 0.0
      %944 = vmatpush1.msra.mxu0 %v911
      %945 = vmatprep.subr.mxu0 0.0
      %946 = vmatpush1.msra.mxu0 %v910
      %947 = vmatprep.subr.mxu0 0.0
      %948 = vmatpush1.msra.mxu0 %v909
      %949 = vmatprep.subr.mxu0 0.0
      %950 = vmatpush1.msra.mxu0 %v908
      %951 = vmatprep.subr.mxu0 0.0
      %952 = vmatpush2.msra.mxu0 0.0
      %953 = vmatprep.subr.mxu0 0.0
      %954 = vmatpush2.msra.mxu0 0.0
      %955 = vmatprep.subr.mxu0 0.0
      %956 = vmatpush2.msra.mxu0 0.0
      %957 = vmatprep.subr.mxu0 0.0
      %958 = vmatpush2.msra.mxu0 0.0
      %959 = vmatprep.subr.mxu0 0.0
      %960 = vmatpush2.msra.mxu0 0.0
      %961 = vmatprep.subr.mxu0 0.0
      %962 = vmatpush2.msra.mxu0 0.0
      %963 = vmatprep.subr.mxu0 0.0
      %964 = vmatpush2.msra.mxu0 0.0
      %965 = vmatprep.subr.mxu0 0.0
      %966 = vmatpush2.msra.mxu0 0.0
      %967 = vmatprep.subr.mxu0 0.0
      %968 = vmatpush2.msra.mxu0 0.0
      %969 = vmatprep.subr.mxu0 0.0
      %970 = vmatpush2.msra.mxu0 0.0
      %971 = vmatprep.subr.mxu0 0.0
      %972 = vmatpush2.msra.mxu0 0.0
      %973 = vmatprep.subr.mxu0 0.0
      %974 = vmatpush2.msra.mxu0 0.0
      %975 = vmatprep.subr.mxu0 0.0
      %976 = vmatpush2.msra.mxu0 0.0
      %977 = vmatprep.subr.mxu0 0.0
      %978 = vmatpush2.msra.mxu0 0.0
      %979 = vmatprep.subr.mxu0 0.0
      %980 = vmatpush2.msra.mxu0 0.0
      %981 = vmatprep.subr.mxu0 0.0
      %982 = vmatpush2.msra.mxu0 0.0
      %983 = vmatprep.mubr.f32.mxu0 0.0
      %984 = vmatmul.mubr.f32.gmra.mxu0 %v917
      %v985 = vpop.f32.mrf.mxu0
      %v986 = vadd.f32 0.0, %v985
      %v987 = vpop.f32.mrf.mxu0
      %988 = vdwg.mxu0
      %v990 = vsel %vm328, %v897, 0
      %992 = vmatprep.subr.mxu0 0.0
      %993 = vmatpush1.msra.mxu0 0.0
      %994 = vmatprep.subr.mxu0 0.0
      %995 = vmatpush1.msra.mxu0 0.0
      %996 = vmatprep.subr.mxu0 0.0
      %997 = vmatpush1.msra.mxu0 0.0
      %998 = vmatprep.subr.mxu0 0.0
      %999 = vmatpush1.msra.mxu0 0.0
      %1000 = vmatprep.subr.mxu0 0.0
      %1001 = vmatpush1.msra.mxu0 0.0
      %1002 = vmatprep.subr.mxu0 0.0
      %1003 = vmatpush1.msra.mxu0 0.0
      %1004 = vmatprep.subr.mxu0 0.0
      %1005 = vmatpush1.msra.mxu0 0.0
      %1006 = vmatprep.subr.mxu0 0.0
      %1007 = vmatpush1.msra.mxu0 0.0
      %1008 = vmatprep.subr.mxu0 0.0
      %1009 = vmatpush1.msra.mxu0 %v905
      %1010 = vmatprep.subr.mxu0 0.0
      %1011 = vmatpush1.msra.mxu0 %v904
      %1012 = vmatprep.subr.mxu0 0.0
      %1013 = vmatpush1.msra.mxu0 %v903
      %1014 = vmatprep.subr.mxu0 0.0
      %1015 = vmatpush1.msra.mxu0 %v902
      %1016 = vmatprep.subr.mxu0 0.0
      %1017 = vmatpush1.msra.mxu0 %v901
      %1018 = vmatprep.subr.mxu0 0.0
      %1019 = vmatpush1.msra.mxu0 %v900
      %1020 = vmatprep.subr.mxu0 0.0
      %1021 = vmatpush1.msra.mxu0 %v899
      %1022 = vmatprep.subr.mxu0 0.0
      %1023 = vmatpush1.msra.mxu0 %v898
      %1024 = vmatprep.subr.mxu0 0.0
      %1025 = vmatpush2.msra.mxu0 0.0
      %1026 = vmatprep.subr.mxu0 0.0
      %1027 = vmatpush2.msra.mxu0 0.0
      %1028 = vmatprep.subr.mxu0 0.0
      %1029 = vmatpush2.msra.mxu0 0.0
      %1030 = vmatprep.subr.mxu0 0.0
      %1031 = vmatpush2.msra.mxu0 0.0
      %1032 = vmatprep.subr.mxu0 0.0
      %1033 = vmatpush2.msra.mxu0 0.0
      %1034 = vmatprep.subr.mxu0 0.0
      %1035 = vmatpush2.msra.mxu0 0.0
      %1036 = vmatprep.subr.mxu0 0.0
      %1037 = vmatpush2.msra.mxu0 0.0
      %1038 = vmatprep.subr.mxu0 0.0
      %1039 = vmatpush2.msra.mxu0 0.0
      %1040 = vmatprep.subr.mxu0 0.0
      %1041 = vmatpush2.msra.mxu0 0.0
      %1042 = vmatprep.subr.mxu0 0.0
      %1043 = vmatpush2.msra.mxu0 0.0
      %1044 = vmatprep.subr.mxu0 0.0
      %1045 = vmatpush2.msra.mxu0 0.0
      %1046 = vmatprep.subr.mxu0 0.0
      %1047 = vmatpush2.msra.mxu0 0.0
      %1048 = vmatprep.subr.mxu0 0.0
      %1049 = vmatpush2.msra.mxu0 0.0
      %1050 = vmatprep.subr.mxu0 0.0
      %1051 = vmatpush2.msra.mxu0 0.0
      %1052 = vmatprep.subr.mxu0 0.0
      %1053 = vmatpush2.msra.mxu0 0.0
      %1054 = vmatprep.subr.mxu0 0.0
      %1055 = vmatpush2.msra.mxu0 0.0
      %1056 = vmatprep.mubr.f32.mxu0 0.0
      %1057 = vmatmul.mubr.f32.gmra.mxu0 %v990
      %v1058 = vpop.f32.mrf.mxu0
      %v1059 = vadd.f32 %v986, %v1058
      %v1060 = vpop.f32.mrf.mxu0
      %1061 = vdwg.mxu0
      %v1062 = vld [vmem:[#allocation4 + $0x2] sm:$0xff]
      %s1063 = scalar_lea.vmem %s5, 128
      %v1064 = vld [vmem:[%s1063] sm:$0xff]
      %v1065 = vld [vmem:[%s1063 + $0x8] sm:$0xff]
      %v1066 = vld [vmem:[%s1063 + $0x10] sm:$0xff]
      %v1067 = vld [vmem:[%s1063 + $0x18] sm:$0xff]
      %v1068 = vld [vmem:[%s1063 + $0x20] sm:$0xff]
      %v1069 = vld [vmem:[%s1063 + $0x28] sm:$0xff]
      %v1070 = vld [vmem:[%s1063 + $0x30] sm:$0xff]
      %v1071 = vld [vmem:[%s1063 + $0x38] sm:$0xff]
      %v1073 = vsel %vm328, %v1062, 0
      %1075 = vmatprep.subr.mxu0 0.0
      %1076 = vmatpush1.msra.mxu0 0.0
      %1077 = vmatprep.subr.mxu0 0.0
      %1078 = vmatpush1.msra.mxu0 0.0
      %1079 = vmatprep.subr.mxu0 0.0
      %1080 = vmatpush1.msra.mxu0 0.0
      %1081 = vmatprep.subr.mxu0 0.0
      %1082 = vmatpush1.msra.mxu0 0.0
      %1083 = vmatprep.subr.mxu0 0.0
      %1084 = vmatpush1.msra.mxu0 0.0
      %1085 = vmatprep.subr.mxu0 0.0
      %1086 = vmatpush1.msra.mxu0 0.0
      %1087 = vmatprep.subr.mxu0 0.0
      %1088 = vmatpush1.msra.mxu0 0.0
      %1089 = vmatprep.subr.mxu0 0.0
      %1090 = vmatpush1.msra.mxu0 0.0
      %1091 = vmatprep.subr.mxu0 0.0
      %1092 = vmatpush1.msra.mxu0 %v1071
      %1093 = vmatprep.subr.mxu0 0.0
      %1094 = vmatpush1.msra.mxu0 %v1070
      %1095 = vmatprep.subr.mxu0 0.0
      %1096 = vmatpush1.msra.mxu0 %v1069
      %1097 = vmatprep.subr.mxu0 0.0
      %1098 = vmatpush1.msra.mxu0 %v1068
      %1099 = vmatprep.subr.mxu0 0.0
      %1100 = vmatpush1.msra.mxu0 %v1067
      %1101 = vmatprep.subr.mxu0 0.0
      %1102 = vmatpush1.msra.mxu0 %v1066
      %1103 = vmatprep.subr.mxu0 0.0
      %1104 = vmatpush1.msra.mxu0 %v1065
      %1105 = vmatprep.subr.mxu0 0.0
      %1106 = vmatpush1.msra.mxu0 %v1064
      %1107 = vmatprep.subr.mxu0 0.0
      %1108 = vmatpush2.msra.mxu0 0.0
      %1109 = vmatprep.subr.mxu0 0.0
      %1110 = vmatpush2.msra.mxu0 0.0
      %1111 = vmatprep.subr.mxu0 0.0
      %1112 = vmatpush2.msra.mxu0 0.0
      %1113 = vmatprep.subr.mxu0 0.0
      %1114 = vmatpush2.msra.mxu0 0.0
      %1115 = vmatprep.subr.mxu0 0.0
      %1116 = vmatpush2.msra.mxu0 0.0
      %1117 = vmatprep.subr.mxu0 0.0
      %1118 = vmatpush2.msra.mxu0 0.0
      %1119 = vmatprep.subr.mxu0 0.0
      %1120 = vmatpush2.msra.mxu0 0.0
      %1121 = vmatprep.subr.mxu0 0.0
      %1122 = vmatpush2.msra.mxu0 0.0
      %1123 = vmatprep.subr.mxu0 0.0
      %1124 = vmatpush2.msra.mxu0 0.0
      %1125 = vmatprep.subr.mxu0 0.0
      %1126 = vmatpush2.msra.mxu0 0.0
      %1127 = vmatprep.subr.mxu0 0.0
      %1128 = vmatpush2.msra.mxu0 0.0
      %1129 = vmatprep.subr.mxu0 0.0
      %1130 = vmatpush2.msra.mxu0 0.0
      %1131 = vmatprep.subr.mxu0 0.0
      %1132 = vmatpush2.msra.mxu0 0.0
      %1133 = vmatprep.subr.mxu0 0.0
      %1134 = vmatpush2.msra.mxu0 0.0
      %1135 = vmatprep.subr.mxu0 0.0
      %1136 = vmatpush2.msra.mxu0 0.0
      %1137 = vmatprep.subr.mxu0 0.0
      %1138 = vmatpush2.msra.mxu0 0.0
      %1139 = vmatprep.mubr.f32.mxu0 0.0
      %1140 = vmatmul.mubr.f32.gmra.mxu0 %v1073
      %v1141 = vpop.f32.mrf.mxu0
      %v1142 = vadd.f32 0.0, %v1141
      %v1143 = vpop.f32.mrf.mxu0
      %1144 = vdwg.mxu0
      %v1145 = vadd.f32 %v1059, %v1142
      %v1146 = vld [vmem:[%s6] sm:$0x1]
      %v1148 = vlaneseq
      %v1149 = vshrl.u32 %v1148, 7
      %v1150 = vsub.s32 0, %v1149
      %v1151 = vrot.slane %v1146, %v1150
      %v1153 = vadd.f32 %v1145, %v1151
      %v1154 = vmax.f32 %v1153, 0.0
      %1155 = vst.msk [vmem:[%s276] sm:$0xff] %vm328, %v1154
      %p1156 = scmp.lt.s32.totalorder %s18, 1
      %s1157 = scalar_select %p1156, %s18, 1
      %s1158 = smul.addr %s1157, 8
      %s1159 = scalar_lea.vmem %s7, %s1158
      // Predicated region
      $region49: #{block_forward.1} parent=47 // pred_check
        %p1160 = pneg %p188
      $region50: #{block_forward.1} parent=47 // pred_check_branch
        %1162 = sbr.rel (%p1160) target = $region52
      $region51: #{block_forward.1} parent=47 // pred_region
        _
      $region52: #{block_forward.1} parent=47 // pred_fallthru
        _
    $region48: #{block_forward.1} parent=5 // pred_fallthru
      _
    %p1163 = scmp.le.s32.totalorder 2, %s13
    // Predicated region
    $region53: #{block_forward.1} parent=5 // pred_check
      %p1164 = pneg %p1163
    $region54: #{block_forward.1} parent=5 // pred_check_branch
      %1166 = sbr.rel (%p1164) target = $region56
    $region55: #{block_forward.1} parent=5 // pred_region
      %s1167 = ssub.s32 %s13, 2
      // Predicated region
      $region57: #{block_forward.1} parent=55 // pred_check
        %p1168 = pneg %p194
      $region58: #{block_forward.1} parent=55 // pred_check_branch
        %1170 = sbr.rel (%p1168) target = $region60
      $region59: #{block_forward.1} parent=55 // pred_region
        %p1171 = scmp.lt.s32.totalorder %s19, 1
        %s1172 = scalar_select %p1171, %s19, 1
        %s1173 = smul.addr %s1172, 8
        %s1174 = scalar_lea.vmem %s7, %s1173
      $region60: #{block_forward.1} parent=55 // pred_fallthru
        _
    $region56: #{block_forward.1} parent=5 // pred_fallthru
      _
  $region6: #{block_forward.1} parent=0 // loop_footer
    %s17 = sadd.s32 1, %s13
  $region7: #{block_forward.1} parent=0 // loop_footer_branch
    %12 = sbr.rel target = $region3
  $region8: #{block_forward.1} parent=0 // loop_exit
    _

</llo_original>
